<compile_context>
chip_gen: v6e
topology: v6e:2x2x1
jax: 0.10.0
libtpu: 0.0.40
codegen_flags: <defaults>
</compile_context>

<pallas_src>
import functools

import numpy as np
import jax
import jax.numpy as jnp
from jax.experimental import pallas as pl
from jax.experimental.pallas import tpu as pltpu

F32 = jnp.float32
_VMEM = pl.BlockSpec(memory_space=pltpu.MemorySpace.VMEM)


# ----------------------------- constant builders -----------------------------

def hann_window(N):
    # torch.hann_window (periodic)
    n = np.arange(N, dtype=np.float64)
    return 0.5 - 0.5 * np.cos(2.0 * np.pi * n / N)


def _hz_to_mel(f):
    return 2595.0 * np.log10(1.0 + f / 700.0)


def _mel_to_hz(m):
    return 700.0 * (10.0 ** (m / 2595.0) - 1.0)


def melscale_fbanks(n_freqs, f_min, f_max, n_mels, sample_rate):
    # matches torchaudio.functional.melscale_fbanks(norm=None, mel_scale='htk')
    all_freqs = np.linspace(0, sample_rate // 2, n_freqs)
    m_pts = np.linspace(_hz_to_mel(f_min), _hz_to_mel(f_max), n_mels + 2)
    f_pts = _mel_to_hz(m_pts)
    f_diff = f_pts[1:] - f_pts[:-1]
    slopes = f_pts[None, :] - all_freqs[:, None]          # (n_freqs, n_mels+2)
    down = (-slopes[:, :-2]) / f_diff[:-1]
    up = slopes[:, 2:] / f_diff[1:]
    return np.maximum(0.0, np.minimum(down, up))          # (n_freqs, n_mels)


def create_dct(n_mfcc, n_mels):
    # matches torchaudio.functional.create_dct(norm='ortho'); returns (n_mels, n_mfcc)
    n = np.arange(n_mels, dtype=np.float64)
    k = np.arange(n_mfcc, dtype=np.float64)[:, None]
    dct = np.cos(np.pi / n_mels * (n + 0.5) * k)
    dct[0] *= 1.0 / np.sqrt(2.0)
    dct *= np.sqrt(2.0 / n_mels)
    return dct.T


def _round_up(x, m):
    return (x + m - 1) // m * m


def build_frontend_consts(sr, n_fft, hop, n_mels, n_mfcc):
    """Pre-baked constant matrices; Hann window folded into the DFT matrix."""
    n_freq = n_fft // 2 + 1
    nfp = _round_up(n_freq, 128)                  # lane-aligned frequency padding
    win = hann_window(n_fft)
    k = np.arange(n_fft, dtype=np.float64)[:, None]
    f = np.arange(n_freq, dtype=np.float64)[None, :]
    ang = 2.0 * np.pi * k * f / n_fft
    cos_w = np.zeros((n_fft, nfp))
    sin_w = np.zeros((n_fft, nfp))
    cos_w[:, :n_freq] = win[:, None] * np.cos(ang)
    sin_w[:, :n_freq] = win[:, None] * np.sin(ang)
    trig = np.concatenate([cos_w, sin_w], axis=1)         # (n_fft, 2*nfp)
    mel = np.zeros((nfp, n_mels))
    mel[:n_freq, :] = melscale_fbanks(n_freq, 20.0, 8000.0, n_mels, sr)
    dct = create_dct(n_mfcc, n_mels)                      # (n_mels, n_mfcc)
    lwin = hann_window(hop)
    lw2 = (lwin * lwin / hop)[None, :]                    # (1, hop): win^2 / hop
    return (jnp.asarray(trig, F32), jnp.asarray(mel, F32),
            jnp.asarray(dct, F32), jnp.asarray(lw2, F32), nfp)


# --------------------- fused front-end kernel (loudness+MFCC+IN) --------------

def _frontend_kernel(ch_ref, trig_ref, mel_ref, dct_ref, lw2_ref, g_ref, bt_ref,
                     loud_ref, x_ref,
                     *, B, n_chunks, hop, n_fft, nfp, n_frames, Tf, Fl, pad_chunks,
                     n_mfcc):
    ch = ch_ref[...]                                      # (B*n_chunks, hop)
    lw2 = lw2_ref[...]                                    # (1, hop)
    gamma = g_ref[...]                                    # (1, n_mfcc)
    beta = bt_ref[...]                                    # (1, n_mfcc)
    melm = mel_ref[...]                                   # (nfp, n_mels)
    dctm = dct_ref[...]                                   # (n_mels, n_mfcc)

    R = n_fft // hop
    # hoisted: row-blocks of the (window-folded) DFT matrix, one per chunk offset
    wjs = [trig_ref[j * hop:(j + 1) * hop, :] for j in range(R)]   # (hop, 2*nfp)

    for b in range(B):                                    # B is tiny and static
        base = b * n_chunks

        # ---- loudness: Hann-weighted RMS over non-overlapping hop frames ----
        lrows = ch[base + pad_chunks: base + pad_chunks + Fl, :]     # (Fl, hop)
        lpow = jnp.sum(lrows * lrows * lw2, axis=-1, keepdims=True)  # (Fl, 1)
        loud_ref[:, b:b + 1] = jnp.sqrt(lpow)

        # ---- STFT power via shifted-chunk partial DFTs (frames never copied) ----
        spec = None
        for j in range(R):
            cj = ch[base + j: base + j + n_frames, :]                # (F, hop)
            pj = jnp.dot(cj, wjs[j], preferred_element_type=jnp.float32)
            spec = pj if spec is None else spec + pj                 # (F, 2*nfp)
        re = spec[:, :nfp]
        im = spec[:, nfp:]
        power = re * re + im * im                                    # (F, nfp)

        # ---- mel -> log (log_mels=True) -> DCT ----
        mel = jnp.dot(power, melm, preferred_element_type=jnp.float32)
        logmel = jnp.log(mel + 1e-6)
        mfcc = jnp.dot(logmel, dctm, preferred_element_type=jnp.float32)  # (F, C)

        # ---- drop last frame + InstanceNorm1d over time (affine per channel) ----
        mb = mfcc[:Tf, :]                                            # (Tf, C)
        mean = jnp.mean(mb, axis=0, keepdims=True)
        var = jnp.mean((mb - mean) ** 2, axis=0, keepdims=True)
        xb = (mb - mean) * jax.lax.rsqrt(var + 1e-5) * gamma + beta

        # time-major output: lanes [b*C, (b+1)*C) of row t  <=>  flat row t*B+b
        x_ref[:, b * n_mfcc:(b + 1) * n_mfcc] = xb


def frontend_pallas(audio, gamma, beta, *, sr, n_fft, hop, n_mels, n_mfcc):
    B, T = audio.shape
    pad = n_fft // 2
    assert n_fft % hop == 0 and T % hop == 0 and pad % hop == 0
    padded = jnp.pad(audio, ((0, 0), (pad, pad)), mode="reflect")    # center=True
    n_chunks = (T + 2 * pad) // hop
    chunks = padded.reshape(B * n_chunks, hop)        # free reshape, no duplication
    n_frames = 1 + T // hop                           # MFCC frames
    Fl = T // hop                                     # loudness frames
    Tf = n_frames - 1                                 # x[:, :, :-1]

    trig, mel, dct, lw2, nfp = build_frontend_consts(sr, n_fft, hop, n_mels, n_mfcc)

    kernel = functools.partial(
        _frontend_kernel, B=B, n_chunks=n_chunks, hop=hop, n_fft=n_fft, nfp=nfp,
        n_frames=n_frames, Tf=Tf, Fl=Fl, pad_chunks=pad // hop, n_mfcc=n_mfcc)

    loud_t, x_2d = pl.pallas_call(
        kernel,
        out_shape=(jax.ShapeDtypeStruct((Fl, B), F32),
                   jax.ShapeDtypeStruct((Tf, B * n_mfcc), F32)),
        in_specs=[_VMEM] * 7,
        out_specs=(_VMEM, _VMEM),
    )(chunks, trig, mel, dct, lw2, gamma, beta)

    loudness = loud_t.T                               # (B, Fl), tiny XLA transpose
    x_flat = x_2d.reshape(Tf * B, n_mfcc)             # free reshape: row = t*B + b
    return loudness, x_flat, Tf


# ----------------------------- GRU + Linear kernel -----------------------------

def _gru_dense_kernel(x_ref,
                      wir_ref, wiz_ref, win_ref,
                      whr_ref, whz_ref, whn_ref,
                      bir_ref, biz_ref, bin_ref,
                      bhr_ref, bhz_ref, bhn_ref,
                      wd_ref, bd_ref,
                      o_ref, hs_ref, *, Tf, B, H):
    x2 = x_ref[...]                                   # (Tf*B, C) time-major

    # hoisted input projection: one matmul per gate over ALL time steps
    gi_r = jnp.dot(x2, wir_ref[...], preferred_element_type=jnp.float32) + bir_ref[...]
    gi_z = jnp.dot(x2, wiz_ref[...], preferred_element_type=jnp.float32) + biz_ref[...]
    gi_n = jnp.dot(x2, win_ref[...], preferred_element_type=jnp.float32) + bin_ref[...]

    # hoisted weight/bias loads (no per-iteration re-broadcast)
    whr = whr_ref[...]
    whz = whz_ref[...]
    whn = whn_ref[...]
    bhr = bhr_ref[...]
    bhz = bhz_ref[...]
    bhn = bhn_ref[...]

    h = jnp.zeros((B, H), jnp.float32)
    # fully-unrolled recurrence (PyTorch gate order r, z, n); only the
    # (B,H)@(H,H) matmuls + EUP sigmoid/tanh stay on the sequential path.
    for t in range(Tf):
        sl = slice(t * B, (t + 1) * B)
        r = jax.nn.sigmoid(gi_r[sl, :] +
                           jnp.dot(h, whr, preferred_element_type=jnp.float32) + bhr)
        z = jax.nn.sigmoid(gi_z[sl, :] +
                           jnp.dot(h, whz, preferred_element_type=jnp.float32) + bhz)
        n = jnp.tanh(gi_n[sl, :] +
                     r * (jnp.dot(h, whn, preferred_element_type=jnp.float32) + bhn))
        h = (1.0 - z) * n + z * h
        hs_ref[sl, :] = h                             # stack hidden states in VMEM

    # hoisted output Linear: ONE matmul over all stacked hidden states
    o_ref[...] = (jnp.dot(hs_ref[...], wd_ref[...],
                          preferred_element_type=jnp.float32) + bd_ref[...])


def gru_dense_pallas(x_flat, params, *, Tf, B):
    H = params["whr"].shape[0]
    Z = params["wd"].shape[1]
    kernel = functools.partial(_gru_dense_kernel, Tf=Tf, B=B, H=H)

    out = pl.pallas_call(
        kernel,
        out_shape=jax.ShapeDtypeStruct((Tf * B, Z), F32),
        in_specs=[_VMEM] * 15,
        out_specs=_VMEM,
        scratch_shapes=[pltpu.VMEM((Tf * B, H), jnp.float32)],
    )(x_flat,
      params["wir"], params["wiz"], params["win"],
      params["whr"], params["whz"], params["whn"],
      params["bir"], params["biz"], params["bin"],
      params["bhr"], params["bhz"], params["bhn"],
      params["wd"], params["bd"])

    return out.reshape(Tf, B, Z).transpose(1, 0, 2)   # (B, Tf, Z), batch_first


# ------------------------------- full forward ----------------------------------

def init_params(key, n_mfcc, gru_units, z_units):
    ks = jax.random.split(key, 14)
    bound = 1.0 / np.sqrt(gru_units)
    u = lambda k, shp: jax.random.uniform(k, shp, F32, -bound, bound)
    H = gru_units
    return dict(
        in_gamma=jnp.ones((1, n_mfcc), F32),          # InstanceNorm1d affine
        in_beta=jnp.zeros((1, n_mfcc), F32),
        # per-gate GRU weights (PyTorch gate order r, z, n), stored transposed
        wir=u(ks[0], (n_mfcc, H)), wiz=u(ks[1], (n_mfcc, H)), win=u(ks[2], (n_mfcc, H)),
        whr=u(ks[3], (H, H)), whz=u(ks[4], (H, H)), whn=u(ks[5], (H, H)),
        bir=u(ks[6], (1, H)), biz=u(ks[7], (1, H)), bin=u(ks[8], (1, H)),
        bhr=u(ks[9], (1, H)), bhz=u(ks[10], (1, H)), bhn=u(ks[11], (1, H)),
        wd=u(ks[12], (H, z_units)), bd=u(ks[13], (1, z_units)),
    )


def encoder_forward(batch, params, cfg):
    audio = batch["audio"]
    out = dict(batch)

    loudness, x_flat, Tf = frontend_pallas(
        audio, params["in_gamma"], params["in_beta"],
        sr=cfg["sr"], n_fft=cfg["n_fft"], hop=cfg["hop"],
        n_mels=cfg["n_mels"], n_mfcc=cfg["n_mfcc"])
    out["loudness"] = loudness

    out["z"] = gru_dense_pallas(x_flat, params, Tf=Tf, B=audio.shape[0])

    if cfg["sr"] % cfg["hop"] != 0:
        out["loudness"] = out["loudness"][:, :batch["f0"].shape[-1]]
        out["z"] = out["z"][:, :batch["f0"].shape[-1]]
    return out


# ----------------------------------- main ---------------------------------------

if __name__ == "__main__":
    B = 2
    SR = 16000
    FRAME_RES = 0.004
    HOP = int(SR * FRAME_RES)          # 64
    T = 1024                           # audio samples
    N_FFT = 256
    N_MELS = 32
    N_MFCC = 16
    GRU_UNITS = 64
    Z_UNITS = 16
    N_FRAMES = T // HOP                # 16

    cfg = dict(sr=SR, hop=HOP, n_fft=N_FFT, n_mels=N_MELS, n_mfcc=N_MFCC)

    key = jax.random.PRNGKey(0)
    k_audio, k_f0, k_param = jax.random.split(key, 3)
    audio = 0.1 * jax.random.normal(k_audio, (B, T), F32)
    f0 = jax.random.uniform(k_f0, (B, N_FRAMES), F32, 100.0, 400.0)
    params = init_params(k_param, N_MFCC, GRU_UNITS, Z_UNITS)

    batch = {"audio": audio, "f0": f0}
    out = encoder_forward(batch, params, cfg)

    jax.block_until_ready(out["loudness"])
    jax.block_until_ready(out["z"])

    assert out["loudness"].shape == (B, N_FRAMES)
    assert out["z"].shape == (B, N_FRAMES, Z_UNITS)
    assert bool(jnp.all(jnp.isfinite(out["loudness"])))
    assert bool(jnp.all(jnp.isfinite(out["z"])))
    print("KERNEL_OK")
</pallas_src>

<mosaic_0001>
module attributes {stable_mosaic.version = 11 : i64} {
  func.func @_frontend_kernel(%arg0: memref<40x64xf32, #tpu.memory_space<vmem>>, %arg1: memref<256x512xf32, #tpu.memory_space<vmem>>, %arg2: memref<256x32xf32, #tpu.memory_space<vmem>>, %arg3: memref<32x16xf32, #tpu.memory_space<vmem>>, %arg4: memref<1x64xf32, #tpu.memory_space<vmem>>, %arg5: memref<1x16xf32, #tpu.memory_space<vmem>>, %arg6: memref<1x16xf32, #tpu.memory_space<vmem>>, %arg7: memref<16x2xf32, #tpu.memory_space<vmem>>, %arg8: memref<16x32xf32, #tpu.memory_space<vmem>>) attributes {dimension_semantics = [], scalar_prefetch = 0 : i64, scratch_operands = 0 : i64, tpu.core_type = #tpu.core_type<tc>} {
    %c0 = arith.constant 0 : index
    %c0_0 = arith.constant 0 : index
    %0 = vector.load %arg0[%c0, %c0_0] : memref<40x64xf32, #tpu.memory_space<vmem>>, vector<40x64xf32>
    %c0_1 = arith.constant 0 : index
    %c0_2 = arith.constant 0 : index
    %1 = vector.load %arg4[%c0_1, %c0_2] : memref<1x64xf32, #tpu.memory_space<vmem>>, vector<1x64xf32>
    %c0_3 = arith.constant 0 : index
    %c0_4 = arith.constant 0 : index
    %2 = vector.load %arg5[%c0_3, %c0_4] : memref<1x16xf32, #tpu.memory_space<vmem>>, vector<1x16xf32>
    %c0_5 = arith.constant 0 : index
    %c0_6 = arith.constant 0 : index
    %3 = vector.load %arg6[%c0_5, %c0_6] : memref<1x16xf32, #tpu.memory_space<vmem>>, vector<1x16xf32>
    %c0_7 = arith.constant 0 : index
    %c0_8 = arith.constant 0 : index
    %4 = vector.load %arg2[%c0_7, %c0_8] : memref<256x32xf32, #tpu.memory_space<vmem>>, vector<256x32xf32>
    %c0_9 = arith.constant 0 : index
    %c0_10 = arith.constant 0 : index
    %5 = vector.load %arg3[%c0_9, %c0_10] : memref<32x16xf32, #tpu.memory_space<vmem>>, vector<32x16xf32>
    %c0_11 = arith.constant 0 : index
    %c0_12 = arith.constant 0 : index
    %6 = vector.load %arg1[%c0_11, %c0_12] : memref<256x512xf32, #tpu.memory_space<vmem>>, vector<64x512xf32>
    %c64 = arith.constant 64 : index
    %c0_13 = arith.constant 0 : index
    %7 = vector.load %arg1[%c64, %c0_13] : memref<256x512xf32, #tpu.memory_space<vmem>>, vector<64x512xf32>
    %c128 = arith.constant 128 : index
    %c0_14 = arith.constant 0 : index
    %8 = vector.load %arg1[%c128, %c0_14] : memref<256x512xf32, #tpu.memory_space<vmem>>, vector<64x512xf32>
    %c192 = arith.constant 192 : index
    %c0_15 = arith.constant 0 : index
    %9 = vector.load %arg1[%c192, %c0_15] : memref<256x512xf32, #tpu.memory_space<vmem>>, vector<64x512xf32>
    %10 = vector.extract_strided_slice %0 {offsets = [2, 0], sizes = [16, 64], strides = [1, 1]} : vector<40x64xf32> to vector<16x64xf32>
    %11 = arith.mulf %10, %10 : vector<16x64xf32>
    %12 = vector.broadcast %1 : vector<1x64xf32> to vector<16x64xf32>
    %13 = arith.mulf %11, %12 : vector<16x64xf32>
    %cst = arith.constant dense<0.000000e+00> : vector<16xf32>
    %14 = vector.multi_reduction <add>, %13, %cst [1] : vector<16x64xf32> to vector<16xf32>
    %15 = vector.shape_cast %14 : vector<16xf32> to vector<16x1xf32>
    %16 = math.sqrt %15 : vector<16x1xf32>
    %c0_16 = arith.constant 0 : index
    %c0_17 = arith.constant 0 : index
    %17 = vector.load %arg7[%c0_16, %c0_17] : memref<16x2xf32, #tpu.memory_space<vmem>>, vector<16x1xf32>
    tpu.vector_store %arg7[%c0_16, %c0_17], %16 {strides = array<i32>} : memref<16x2xf32, #tpu.memory_space<vmem>>, vector<16x1xf32>,
    %18 = vector.extract_strided_slice %0 {offsets = [0, 0], sizes = [17, 64], strides = [1, 1]} : vector<40x64xf32> to vector<17x64xf32>
    %cst_18 = arith.constant dense<0.000000e+00> : vector<17x512xf32>
    %19 = tpu.matmul %18, %6, %cst_18 {dimension_numbers = #tpu.dot_dimension_numbers<[1], [0], [0], [1], [0, 0, 1, 1], [], []>} : vector<17x64xf32>, vector<64x512xf32>, vector<17x512xf32> -> vector<17x512xf32>
    %20 = vector.extract_strided_slice %0 {offsets = [1, 0], sizes = [17, 64], strides = [1, 1]} : vector<40x64xf32> to vector<17x64xf32>
    %cst_19 = arith.constant dense<0.000000e+00> : vector<17x512xf32>
    %21 = tpu.matmul %20, %7, %cst_19 {dimension_numbers = #tpu.dot_dimension_numbers<[1], [0], [0], [1], [0, 0, 1, 1], [], []>} : vector<17x64xf32>, vector<64x512xf32>, vector<17x512xf32> -> vector<17x512xf32>
    %22 = arith.addf %19, %21 : vector<17x512xf32>
    %23 = vector.extract_strided_slice %0 {offsets = [2, 0], sizes = [17, 64], strides = [1, 1]} : vector<40x64xf32> to vector<17x64xf32>
    %cst_20 = arith.constant dense<0.000000e+00> : vector<17x512xf32>
    %24 = tpu.matmul %23, %8, %cst_20 {dimension_numbers = #tpu.dot_dimension_numbers<[1], [0], [0], [1], [0, 0, 1, 1], [], []>} : vector<17x64xf32>, vector<64x512xf32>, vector<17x512xf32> -> vector<17x512xf32>
    %25 = arith.addf %22, %24 : vector<17x512xf32>
    %26 = vector.extract_strided_slice %0 {offsets = [3, 0], sizes = [17, 64], strides = [1, 1]} : vector<40x64xf32> to vector<17x64xf32>
    %cst_21 = arith.constant dense<0.000000e+00> : vector<17x512xf32>
    %27 = tpu.matmul %26, %9, %cst_21 {dimension_numbers = #tpu.dot_dimension_numbers<[1], [0], [0], [1], [0, 0, 1, 1], [], []>} : vector<17x64xf32>, vector<64x512xf32>, vector<17x512xf32> -> vector<17x512xf32>
    %28 = arith.addf %25, %27 : vector<17x512xf32>
    %29 = vector.extract_strided_slice %28 {offsets = [0, 0], sizes = [17, 256], strides = [1, 1]} : vector<17x512xf32> to vector<17x256xf32>
    %30 = vector.extract_strided_slice %28 {offsets = [0, 256], sizes = [17, 256], strides = [1, 1]} : vector<17x512xf32> to vector<17x256xf32>
    %31 = arith.mulf %29, %29 : vector<17x256xf32>
    %32 = arith.mulf %30, %30 : vector<17x256xf32>
    %33 = arith.addf %31, %32 : vector<17x256xf32>
    %cst_22 = arith.constant dense<0.000000e+00> : vector<17x32xf32>
    %34 = tpu.matmul %33, %4, %cst_22 {dimension_numbers = #tpu.dot_dimension_numbers<[1], [0], [0], [1], [0, 0, 1, 1], [], []>} : vector<17x256xf32>, vector<256x32xf32>, vector<17x32xf32> -> vector<17x32xf32>
    %cst_23 = arith.constant 9.99999997E-7 : f32
    %35 = vector.broadcast %cst_23 : f32 to vector<17x32xf32>
    %36 = arith.addf %34, %35 : vector<17x32xf32>
    %37 = math.log %36 : vector<17x32xf32>
    %cst_24 = arith.constant dense<0.000000e+00> : vector<17x16xf32>
    %38 = tpu.matmul %37, %5, %cst_24 {dimension_numbers = #tpu.dot_dimension_numbers<[1], [0], [0], [1], [0, 0, 1, 1], [], []>} : vector<17x32xf32>, vector<32x16xf32>, vector<17x16xf32> -> vector<17x16xf32>
    %39 = vector.extract_strided_slice %38 {offsets = [0, 0], sizes = [16, 16], strides = [1, 1]} : vector<17x16xf32> to vector<16x16xf32>
    %cst_25 = arith.constant dense<0.000000e+00> : vector<16xf32>
    %40 = vector.multi_reduction <add>, %39, %cst_25 [0] : vector<16x16xf32> to vector<16xf32>
    %41 = vector.shape_cast %40 : vector<16xf32> to vector<1x16xf32>
    %cst_26 = arith.constant 1.600000e+01 : f32
    %42 = vector.broadcast %cst_26 : f32 to vector<1x16xf32>
    %43 = arith.divf %41, %42 : vector<1x16xf32>
    %44 = vector.broadcast %43 : vector<1x16xf32> to vector<16x16xf32>
    %45 = arith.subf %39, %44 : vector<16x16xf32>
    %46 = arith.mulf %45, %45 : vector<16x16xf32>
    %cst_27 = arith.constant dense<0.000000e+00> : vector<16xf32>
    %47 = vector.multi_reduction <add>, %46, %cst_27 [0] : vector<16x16xf32> to vector<16xf32>
    %48 = vector.shape_cast %47 : vector<16xf32> to vector<1x16xf32>
    %cst_28 = arith.constant 1.600000e+01 : f32
    %49 = vector.broadcast %cst_28 : f32 to vector<1x16xf32>
    %50 = arith.divf %48, %49 : vector<1x16xf32>
    %51 = vector.broadcast %43 : vector<1x16xf32> to vector<16x16xf32>
    %52 = arith.subf %39, %51 : vector<16x16xf32>
    %cst_29 = arith.constant 9.99999974E-6 : f32
    %53 = vector.broadcast %cst_29 : f32 to vector<1x16xf32>
    %54 = arith.addf %50, %53 : vector<1x16xf32>
    %55 = math.rsqrt %54 : vector<1x16xf32>
    %56 = vector.broadcast %55 : vector<1x16xf32> to vector<16x16xf32>
    %57 = arith.mulf %52, %56 : vector<16x16xf32>
    %58 = vector.broadcast %2 : vector<1x16xf32> to vector<16x16xf32>
    %59 = arith.mulf %57, %58 : vector<16x16xf32>
    %60 = vector.broadcast %3 : vector<1x16xf32> to vector<16x16xf32>
    %61 = arith.addf %59, %60 : vector<16x16xf32>
    %c0_30 = arith.constant 0 : index
    %c0_31 = arith.constant 0 : index
    %62 = vector.load %arg8[%c0_30, %c0_31] : memref<16x32xf32, #tpu.memory_space<vmem>>, vector<16x16xf32>
    tpu.vector_store %arg8[%c0_30, %c0_31], %61 {strides = array<i32>} : memref<16x32xf32, #tpu.memory_space<vmem>>, vector<16x16xf32>,
    %63 = vector.extract_strided_slice %0 {offsets = [22, 0], sizes = [16, 64], strides = [1, 1]} : vector<40x64xf32> to vector<16x64xf32>
    %64 = arith.mulf %63, %63 : vector<16x64xf32>
    %65 = vector.broadcast %1 : vector<1x64xf32> to vector<16x64xf32>
    %66 = arith.mulf %64, %65 : vector<16x64xf32>
    %cst_32 = arith.constant dense<0.000000e+00> : vector<16xf32>
    %67 = vector.multi_reduction <add>, %66, %cst_32 [1] : vector<16x64xf32> to vector<16xf32>
    %68 = vector.shape_cast %67 : vector<16xf32> to vector<16x1xf32>
    %69 = math.sqrt %68 : vector<16x1xf32>
    %c0_33 = arith.constant 0 : index
    %c1 = arith.constant 1 : index
    %70 = vector.load %arg7[%c0_33, %c1] : memref<16x2xf32, #tpu.memory_space<vmem>>, vector<16x1xf32>
    tpu.vector_store %arg7[%c0_33, %c1], %69 {strides = array<i32>} : memref<16x2xf32, #tpu.memory_space<vmem>>, vector<16x1xf32>,
    %71 = vector.extract_strided_slice %0 {offsets = [20, 0], sizes = [17, 64], strides = [1, 1]} : vector<40x64xf32> to vector<17x64xf32>
    %cst_34 = arith.constant dense<0.000000e+00> : vector<17x512xf32>
    %72 = tpu.matmul %71, %6, %cst_34 {dimension_numbers = #tpu.dot_dimension_numbers<[1], [0], [0], [1], [0, 0, 1, 1], [], []>} : vector<17x64xf32>, vector<64x512xf32>, vector<17x512xf32> -> vector<17x512xf32>
    %73 = vector.extract_strided_slice %0 {offsets = [21, 0], sizes = [17, 64], strides = [1, 1]} : vector<40x64xf32> to vector<17x64xf32>
    %cst_35 = arith.constant dense<0.000000e+00> : vector<17x512xf32>
    %74 = tpu.matmul %73, %7, %cst_35 {dimension_numbers = #tpu.dot_dimension_numbers<[1], [0], [0], [1], [0, 0, 1, 1], [], []>} : vector<17x64xf32>, vector<64x512xf32>, vector<17x512xf32> -> vector<17x512xf32>
    %75 = arith.addf %72, %74 : vector<17x512xf32>
    %76 = vector.extract_strided_slice %0 {offsets = [22, 0], sizes = [17, 64], strides = [1, 1]} : vector<40x64xf32> to vector<17x64xf32>
    %cst_36 = arith.constant dense<0.000000e+00> : vector<17x512xf32>
    %77 = tpu.matmul %76, %8, %cst_36 {dimension_numbers = #tpu.dot_dimension_numbers<[1], [0], [0], [1], [0, 0, 1, 1], [], []>} : vector<17x64xf32>, vector<64x512xf32>, vector<17x512xf32> -> vector<17x512xf32>
    %78 = arith.addf %75, %77 : vector<17x512xf32>
    %79 = vector.extract_strided_slice %0 {offsets = [23, 0], sizes = [17, 64], strides = [1, 1]} : vector<40x64xf32> to vector<17x64xf32>
    %cst_37 = arith.constant dense<0.000000e+00> : vector<17x512xf32>
    %80 = tpu.matmul %79, %9, %cst_37 {dimension_numbers = #tpu.dot_dimension_numbers<[1], [0], [0], [1], [0, 0, 1, 1], [], []>} : vector<17x64xf32>, vector<64x512xf32>, vector<17x512xf32> -> vector<17x512xf32>
    %81 = arith.addf %78, %80 : vector<17x512xf32>
    %82 = vector.extract_strided_slice %81 {offsets = [0, 0], sizes = [17, 256], strides = [1, 1]} : vector<17x512xf32> to vector<17x256xf32>
    %83 = vector.extract_strided_slice %81 {offsets = [0, 256], sizes = [17, 256], strides = [1, 1]} : vector<17x512xf32> to vector<17x256xf32>
    %84 = arith.mulf %82, %82 : vector<17x256xf32>
    %85 = arith.mulf %83, %83 : vector<17x256xf32>
    %86 = arith.addf %84, %85 : vector<17x256xf32>
    %cst_38 = arith.constant dense<0.000000e+00> : vector<17x32xf32>
    %87 = tpu.matmul %86, %4, %cst_38 {dimension_numbers = #tpu.dot_dimension_numbers<[1], [0], [0], [1], [0, 0, 1, 1], [], []>} : vector<17x256xf32>, vector<256x32xf32>, vector<17x32xf32> -> vector<17x32xf32>
    %cst_39 = arith.constant 9.99999997E-7 : f32
    %88 = vector.broadcast %cst_39 : f32 to vector<17x32xf32>
    %89 = arith.addf %87, %88 : vector<17x32xf32>
    %90 = math.log %89 : vector<17x32xf32>
    %cst_40 = arith.constant dense<0.000000e+00> : vector<17x16xf32>
    %91 = tpu.matmul %90, %5, %cst_40 {dimension_numbers = #tpu.dot_dimension_numbers<[1], [0], [0], [1], [0, 0, 1, 1], [], []>} : vector<17x32xf32>, vector<32x16xf32>, vector<17x16xf32> -> vector<17x16xf32>
    %92 = vector.extract_strided_slice %91 {offsets = [0, 0], sizes = [16, 16], strides = [1, 1]} : vector<17x16xf32> to vector<16x16xf32>
    %cst_41 = arith.constant dense<0.000000e+00> : vector<16xf32>
    %93 = vector.multi_reduction <add>, %92, %cst_41 [0] : vector<16x16xf32> to vector<16xf32>
    %94 = vector.shape_cast %93 : vector<16xf32> to vector<1x16xf32>
    %cst_42 = arith.constant 1.600000e+01 : f32
    %95 = vector.broadcast %cst_42 : f32 to vector<1x16xf32>
    %96 = arith.divf %94, %95 : vector<1x16xf32>
    %97 = vector.broadcast %96 : vector<1x16xf32> to vector<16x16xf32>
    %98 = arith.subf %92, %97 : vector<16x16xf32>
    %99 = arith.mulf %98, %98 : vector<16x16xf32>
    %cst_43 = arith.constant dense<0.000000e+00> : vector<16xf32>
    %100 = vector.multi_reduction <add>, %99, %cst_43 [0] : vector<16x16xf32> to vector<16xf32>
    %101 = vector.shape_cast %100 : vector<16xf32> to vector<1x16xf32>
    %cst_44 = arith.constant 1.600000e+01 : f32
    %102 = vector.broadcast %cst_44 : f32 to vector<1x16xf32>
    %103 = arith.divf %101, %102 : vector<1x16xf32>
    %104 = vector.broadcast %96 : vector<1x16xf32> to vector<16x16xf32>
    %105 = arith.subf %92, %104 : vector<16x16xf32>
    %cst_45 = arith.constant 9.99999974E-6 : f32
    %106 = vector.broadcast %cst_45 : f32 to vector<1x16xf32>
    %107 = arith.addf %103, %106 : vector<1x16xf32>
    %108 = math.rsqrt %107 : vector<1x16xf32>
    %109 = vector.broadcast %108 : vector<1x16xf32> to vector<16x16xf32>
    %110 = arith.mulf %105, %109 : vector<16x16xf32>
    %111 = vector.broadcast %2 : vector<1x16xf32> to vector<16x16xf32>
    %112 = arith.mulf %110, %111 : vector<16x16xf32>
    %113 = vector.broadcast %3 : vector<1x16xf32> to vector<16x16xf32>
    %114 = arith.addf %112, %113 : vector<16x16xf32>
    %c0_46 = arith.constant 0 : index
    %c16 = arith.constant 16 : index
    %115 = vector.load %arg8[%c0_46, %c16] : memref<16x32xf32, #tpu.memory_space<vmem>>, vector<16x16xf32>
    tpu.vector_store %arg8[%c0_46, %c16], %114 {strides = array<i32>} : memref<16x32xf32, #tpu.memory_space<vmem>>, vector<16x16xf32>,
    return
  }
}

</mosaic_0001>

<llo_original>
// kernel: tpu_custom_call.1
$region0: #{tpu_custom_call.1}
  #allocation0 [shape = 'u32[]', space=smem, size = 0x4, offset = 0x4, fixed_abs, tag = 'smem constant byte address 0x4 - core index']
  #allocation1 [shape = 'u32[144,128]{1,0:T(1,128)}', space=vmem, size = 0x12000, scoped, tag = 'internal scratch']
  %s0 = inlined_call_operand.vmem [shape: f32[40,64], index: 0, kind: input, shape index: {}]
  %s1 = inlined_call_operand.hbm [shape: f32[256,512], index: 1, kind: input, shape index: {}]
  %s2 = inlined_call_operand.vmem [shape: f32[256,32], index: 2, kind: input, shape index: {}]
  %s3 = inlined_call_operand.vmem [shape: f32[32,16], index: 3, kind: input, shape index: {}]
  %s4 = inlined_call_operand.vmem [shape: f32[1,64], index: 4, kind: input, shape index: {}]
  %s5 = inlined_call_operand.vmem [shape: f32[1,16], index: 5, kind: input, shape index: {}]
  %s6 = inlined_call_operand.vmem [shape: f32[1,16], index: 6, kind: input, shape index: {}]
  %s7 = inlined_call_operand.vmem [shape: f32[16,2], index: 7, kind: output, shape index: {0}]
  %s8 = inlined_call_operand.hbm [shape: f32[16,32], index: 8, kind: output, shape index: {1}]
  %9 = xla_tuple %s7, %s8
  %s10 = sld [smem:[#allocation0]]
  $region50: #{tpu_custom_call.1} parent=0
    _
  %s12 = ssub.s32 1, %s10
  %s13 = scalar_select 0, %s12, %s10
  $region1: #{tpu_custom_call.1} parent=0
    #allocation2 [shape = 'u8[524288]{0}', space=vmem, size = 0x80000, scoped, tag = 'input window, operand 1, single buffered']
    #allocation3 [shape = 's32[1]{0}', space=sflag, size = 0x4, scoped, tag = 'scoped memory for tpu_custom_call.1']
    #allocation4 [shape = 's32[1]{0}', space=sflag, size = 0x4, scoped, tag = 'scoped memory for tpu_custom_call.1']
    #allocation5 [shape = 'u8[8192]{0}', space=vmem, size = 0x2000, scoped, tag = 'output window, operand 1, single buffered']
    %14 = vsyncpa [#allocation3], 0
    %15 = vsyncpa [#allocation4], 0
    // Predicated region
    $region2: #{tpu_custom_call.1} parent=1 // pred_check
      _
    $region3: #{tpu_custom_call.1} parent=1 // pred_check_branch
      %17 = sbr.rel (0) target = $region5
    $region4: #{tpu_custom_call.1} parent=1 // pred_region
      _
    $region5: #{tpu_custom_call.1} parent=1 // pred_fallthru
      _
    // Predicated region
    $region6: #{tpu_custom_call.1} parent=1 // pred_check
      _
    $region7: #{tpu_custom_call.1} parent=1 // pred_check_branch
      %19 = sbr.rel (0) target = $region9
    $region8: #{tpu_custom_call.1} parent=1 // pred_region
      %s21 = ssub.s32 16384, 16384
      %22 = vsyncadd [#allocation3], %s21
      %s23 = sshll.u32 [#allocation2], 4
      %s24 = int_to_ptr.vmem [resolvable:$true] %s23
      %29 = dma.hbm_to_vmem [thread:$0]  %s1, 16384, %s24, [#allocation3], 512, 512, 32
    $region9: #{tpu_custom_call.1} parent=1 // pred_fallthru
      _
    // Predicated region
    $region10: #{tpu_custom_call.1} parent=1 // pred_check
      _
    $region11: #{tpu_custom_call.1} parent=1 // pred_check_branch
      %31 = sbr.rel (0) target = $region13
    $region12: #{tpu_custom_call.1} parent=1 // pred_region
      _
    $region13: #{tpu_custom_call.1} parent=1 // pred_fallthru
      _
    // Predicated region
    $region14: #{tpu_custom_call.1} parent=1 // pred_check
      _
    $region15: #{tpu_custom_call.1} parent=1 // pred_check_branch
      %33 = sbr.rel (0) target = $region17
    $region16: #{tpu_custom_call.1} parent=1 // pred_region
      _
    $region17: #{tpu_custom_call.1} parent=1 // pred_fallthru
      _
    // Predicated region
    $region18: #{tpu_custom_call.1} parent=1 // pred_check
      _
    $region19: #{tpu_custom_call.1} parent=1 // pred_check_branch
      %35 = sbr.rel (0) target = $region21
    $region20: #{tpu_custom_call.1} parent=1 // pred_region
      _
    $region21: #{tpu_custom_call.1} parent=1 // pred_fallthru
      _
    // Predicated region
    $region22: #{tpu_custom_call.1} parent=1 // pred_check
      _
    $region23: #{tpu_custom_call.1} parent=1 // pred_check_branch
      %37 = sbr.rel (0) target = $region25
    $region24: #{tpu_custom_call.1} parent=1 // pred_region
      _
    $region25: #{tpu_custom_call.1} parent=1 // pred_fallthru
      _
    // Predicated region
    $region26: #{tpu_custom_call.1} parent=1 // pred_check
      _
    $region27: #{tpu_custom_call.1} parent=1 // pred_check_branch
      %39 = sbr.rel (0) target = $region29
    $region28: #{tpu_custom_call.1} parent=1 // pred_region
      _
    $region29: #{tpu_custom_call.1} parent=1 // pred_fallthru
      _
    // Predicated region
    $region30: #{tpu_custom_call.1} parent=1 // pred_check
      _
    $region31: #{tpu_custom_call.1} parent=1 // pred_check_branch
      %41 = sbr.rel (0) target = $region33
    $region32: #{tpu_custom_call.1} parent=1 // pred_region
      %42 = dma.done [#allocation3], 16384
    $region33: #{tpu_custom_call.1} parent=1 // pred_fallthru
      _
    %v43 = vld [vmem:[%s0] sm:$0xff]
    %v44 = vld [vmem:[%s0 + $0x8] sm:$0xff]
    %v45 = vld [vmem:[%s0 + $0x10] sm:$0xff]
    %v46 = vld [vmem:[%s0 + $0x18] sm:$0xff]
    %v47 = vld [vmem:[%s0 + $0x20] sm:$0xff]
    %v48 = vld [vmem:[%s4] sm:$0x1]
    %v49 = vld [vmem:[%s5] sm:$0x1]
    %v50 = vld [vmem:[%s6] sm:$0x1]
    %v51 = vld [vmem:[%s2] sm:$0xff]
    %v52 = vld [vmem:[%s2 + $0x8] sm:$0xff]
    %v53 = vld [vmem:[%s2 + $0x10] sm:$0xff]
    %v54 = vld [vmem:[%s2 + $0x18] sm:$0xff]
    %v55 = vld [vmem:[%s2 + $0x20] sm:$0xff]
    %v56 = vld [vmem:[%s2 + $0x28] sm:$0xff]
    %v57 = vld [vmem:[%s2 + $0x30] sm:$0xff]
    %v58 = vld [vmem:[%s2 + $0x38] sm:$0xff]
    %v59 = vld [vmem:[%s2 + $0x40] sm:$0xff]
    %v60 = vld [vmem:[%s2 + $0x48] sm:$0xff]
    %v61 = vld [vmem:[%s2 + $0x50] sm:$0xff]
    %v62 = vld [vmem:[%s2 + $0x58] sm:$0xff]
    %v63 = vld [vmem:[%s2 + $0x60] sm:$0xff]
    %v64 = vld [vmem:[%s2 + $0x68] sm:$0xff]
    %v65 = vld [vmem:[%s2 + $0x70] sm:$0xff]
    %v66 = vld [vmem:[%s2 + $0x78] sm:$0xff]
    %v67 = vld [vmem:[%s2 + $0x80] sm:$0xff]
    %v68 = vld [vmem:[%s2 + $0x88] sm:$0xff]
    %v69 = vld [vmem:[%s2 + $0x90] sm:$0xff]
    %v70 = vld [vmem:[%s2 + $0x98] sm:$0xff]
    %v71 = vld [vmem:[%s2 + $0xa0] sm:$0xff]
    %v72 = vld [vmem:[%s2 + $0xa8] sm:$0xff]
    %v73 = vld [vmem:[%s2 + $0xb0] sm:$0xff]
    %v74 = vld [vmem:[%s2 + $0xb8] sm:$0xff]
    %v75 = vld [vmem:[%s2 + $0xc0] sm:$0xff]
    %v76 = vld [vmem:[%s2 + $0xc8] sm:$0xff]
    %v77 = vld [vmem:[%s2 + $0xd0] sm:$0xff]
    %v78 = vld [vmem:[%s2 + $0xd8] sm:$0xff]
    %v79 = vld [vmem:[%s2 + $0xe0] sm:$0xff]
    %v80 = vld [vmem:[%s2 + $0xe8] sm:$0xff]
    %v81 = vld [vmem:[%s2 + $0xf0] sm:$0xff]
    %v82 = vld [vmem:[%s2 + $0xf8] sm:$0xff]
    %v83 = vld [vmem:[%s3] sm:$0xff]
    %v84 = vld [vmem:[%s3 + $0x8] sm:$0xff]
    %v85 = vld [vmem:[%s3 + $0x10] sm:$0xff]
    %v86 = vld [vmem:[%s3 + $0x18] sm:$0xff]
    %v87 = vld [vmem:[#allocation2] sm:$0xff]
    %v88 = vld [vmem:[#allocation2 + $0x8] sm:$0xff]
    %v89 = vld [vmem:[#allocation2 + $0x10] sm:$0xff]
    %v90 = vld [vmem:[#allocation2 + $0x18] sm:$0xff]
    %v91 = vld [vmem:[#allocation2 + $0x20] sm:$0xff]
    %v92 = vld [vmem:[#allocation2 + $0x28] sm:$0xff]
    %v93 = vld [vmem:[#allocation2 + $0x30] sm:$0xff]
    %v94 = vld [vmem:[#allocation2 + $0x38] sm:$0xff]
    %v95 = vld [vmem:[#allocation2 + $0x40] sm:$0xff]
    %v96 = vld [vmem:[#allocation2 + $0x48] sm:$0xff]
    %v97 = vld [vmem:[#allocation2 + $0x50] sm:$0xff]
    %v98 = vld [vmem:[#allocation2 + $0x58] sm:$0xff]
    %v99 = vld [vmem:[#allocation2 + $0x60] sm:$0xff]
    %v100 = vld [vmem:[#allocation2 + $0x68] sm:$0xff]
    %v101 = vld [vmem:[#allocation2 + $0x70] sm:$0xff]
    %v102 = vld [vmem:[#allocation2 + $0x78] sm:$0xff]
    %v103 = vld [vmem:[#allocation2 + $0x80] sm:$0xff]
    %v104 = vld [vmem:[#allocation2 + $0x88] sm:$0xff]
    %v105 = vld [vmem:[#allocation2 + $0x90] sm:$0xff]
    %v106 = vld [vmem:[#allocation2 + $0x98] sm:$0xff]
    %v107 = vld [vmem:[#allocation2 + $0xa0] sm:$0xff]
    %v108 = vld [vmem:[#allocation2 + $0xa8] sm:$0xff]
    %v109 = vld [vmem:[#allocation2 + $0xb0] sm:$0xff]
    %v110 = vld [vmem:[#allocation2 + $0xb8] sm:$0xff]
    %v111 = vld [vmem:[#allocation2 + $0xc0] sm:$0xff]
    %v112 = vld [vmem:[#allocation2 + $0xc8] sm:$0xff]
    %v113 = vld [vmem:[#allocation2 + $0xd0] sm:$0xff]
    %v114 = vld [vmem:[#allocation2 + $0xd8] sm:$0xff]
    %v115 = vld [vmem:[#allocation2 + $0xe0] sm:$0xff]
    %v116 = vld [vmem:[#allocation2 + $0xe8] sm:$0xff]
    %v117 = vld [vmem:[#allocation2 + $0xf0] sm:$0xff]
    %v118 = vld [vmem:[#allocation2 + $0xf8] sm:$0xff]
    %v119 = vld [vmem:[#allocation2 + $0x100] sm:$0xff]
    %v120 = vld [vmem:[#allocation2 + $0x108] sm:$0xff]
    %v121 = vld [vmem:[#allocation2 + $0x110] sm:$0xff]
    %v122 = vld [vmem:[#allocation2 + $0x118] sm:$0xff]
    %v123 = vld [vmem:[#allocation2 + $0x120] sm:$0xff]
    %v124 = vld [vmem:[#allocation2 + $0x128] sm:$0xff]
    %v125 = vld [vmem:[#allocation2 + $0x130] sm:$0xff]
    %v126 = vld [vmem:[#allocation2 + $0x138] sm:$0xff]
    %v127 = vld [vmem:[#allocation2 + $0x140] sm:$0xff]
    %v128 = vld [vmem:[#allocation2 + $0x148] sm:$0xff]
    %v129 = vld [vmem:[#allocation2 + $0x150] sm:$0xff]
    %v130 = vld [vmem:[#allocation2 + $0x158] sm:$0xff]
    %v131 = vld [vmem:[#allocation2 + $0x160] sm:$0xff]
    %v132 = vld [vmem:[#allocation2 + $0x168] sm:$0xff]
    %v133 = vld [vmem:[#allocation2 + $0x170] sm:$0xff]
    %v134 = vld [vmem:[#allocation2 + $0x178] sm:$0xff]
    %v135 = vld [vmem:[#allocation2 + $0x180] sm:$0xff]
    %v136 = vld [vmem:[#allocation2 + $0x188] sm:$0xff]
    %v137 = vld [vmem:[#allocation2 + $0x190] sm:$0xff]
    %v138 = vld [vmem:[#allocation2 + $0x198] sm:$0xff]
    %v139 = vld [vmem:[#allocation2 + $0x1a0] sm:$0xff]
    %v140 = vld [vmem:[#allocation2 + $0x1a8] sm:$0xff]
    %v141 = vld [vmem:[#allocation2 + $0x1b0] sm:$0xff]
    %v142 = vld [vmem:[#allocation2 + $0x1b8] sm:$0xff]
    %v143 = vld [vmem:[#allocation2 + $0x1c0] sm:$0xff]
    %v144 = vld [vmem:[#allocation2 + $0x1c8] sm:$0xff]
    %v145 = vld [vmem:[#allocation2 + $0x1d0] sm:$0xff]
    %v146 = vld [vmem:[#allocation2 + $0x1d8] sm:$0xff]
    %v147 = vld [vmem:[#allocation2 + $0x1e0] sm:$0xff]
    %v148 = vld [vmem:[#allocation2 + $0x1e8] sm:$0xff]
    %v149 = vld [vmem:[#allocation2 + $0x1f0] sm:$0xff]
    %v150 = vld [vmem:[#allocation2 + $0x1f8] sm:$0xff]
    %v151 = vld [vmem:[#allocation2 + $0x200] sm:$0xff]
    %v152 = vld [vmem:[#allocation2 + $0x208] sm:$0xff]
    %v153 = vld [vmem:[#allocation2 + $0x210] sm:$0xff]
    %v154 = vld [vmem:[#allocation2 + $0x218] sm:$0xff]
    %v155 = vld [vmem:[#allocation2 + $0x220] sm:$0xff]
    %v156 = vld [vmem:[#allocation2 + $0x228] sm:$0xff]
    %v157 = vld [vmem:[#allocation2 + $0x230] sm:$0xff]
    %v158 = vld [vmem:[#allocation2 + $0x238] sm:$0xff]
    %v159 = vld [vmem:[#allocation2 + $0x240] sm:$0xff]
    %v160 = vld [vmem:[#allocation2 + $0x248] sm:$0xff]
    %v161 = vld [vmem:[#allocation2 + $0x250] sm:$0xff]
    %v162 = vld [vmem:[#allocation2 + $0x258] sm:$0xff]
    %v163 = vld [vmem:[#allocation2 + $0x260] sm:$0xff]
    %v164 = vld [vmem:[#allocation2 + $0x268] sm:$0xff]
    %v165 = vld [vmem:[#allocation2 + $0x270] sm:$0xff]
    %v166 = vld [vmem:[#allocation2 + $0x278] sm:$0xff]
    %v167 = vld [vmem:[#allocation2 + $0x280] sm:$0xff]
    %v168 = vld [vmem:[#allocation2 + $0x288] sm:$0xff]
    %v169 = vld [vmem:[#allocation2 + $0x290] sm:$0xff]
    %v170 = vld [vmem:[#allocation2 + $0x298] sm:$0xff]
    %v171 = vld [vmem:[#allocation2 + $0x2a0] sm:$0xff]
    %v172 = vld [vmem:[#allocation2 + $0x2a8] sm:$0xff]
    %v173 = vld [vmem:[#allocation2 + $0x2b0] sm:$0xff]
    %v174 = vld [vmem:[#allocation2 + $0x2b8] sm:$0xff]
    %v175 = vld [vmem:[#allocation2 + $0x2c0] sm:$0xff]
    %v176 = vld [vmem:[#allocation2 + $0x2c8] sm:$0xff]
    %v177 = vld [vmem:[#allocation2 + $0x2d0] sm:$0xff]
    %v178 = vld [vmem:[#allocation2 + $0x2d8] sm:$0xff]
    %v179 = vld [vmem:[#allocation2 + $0x2e0] sm:$0xff]
    %v180 = vld [vmem:[#allocation2 + $0x2e8] sm:$0xff]
    %v181 = vld [vmem:[#allocation2 + $0x2f0] sm:$0xff]
    %v182 = vld [vmem:[#allocation2 + $0x2f8] sm:$0xff]
    %v183 = vld [vmem:[#allocation2 + $0x300] sm:$0xff]
    %v184 = vld [vmem:[#allocation2 + $0x308] sm:$0xff]
    %v185 = vld [vmem:[#allocation2 + $0x310] sm:$0xff]
    %v186 = vld [vmem:[#allocation2 + $0x318] sm:$0xff]
    %v187 = vld [vmem:[#allocation2 + $0x320] sm:$0xff]
    %v188 = vld [vmem:[#allocation2 + $0x328] sm:$0xff]
    %v189 = vld [vmem:[#allocation2 + $0x330] sm:$0xff]
    %v190 = vld [vmem:[#allocation2 + $0x338] sm:$0xff]
    %v191 = vld [vmem:[#allocation2 + $0x340] sm:$0xff]
    %v192 = vld [vmem:[#allocation2 + $0x348] sm:$0xff]
    %v193 = vld [vmem:[#allocation2 + $0x350] sm:$0xff]
    %v194 = vld [vmem:[#allocation2 + $0x358] sm:$0xff]
    %v195 = vld [vmem:[#allocation2 + $0x360] sm:$0xff]
    %v196 = vld [vmem:[#allocation2 + $0x368] sm:$0xff]
    %v197 = vld [vmem:[#allocation2 + $0x370] sm:$0xff]
    %v198 = vld [vmem:[#allocation2 + $0x378] sm:$0xff]
    %v199 = vld [vmem:[#allocation2 + $0x380] sm:$0xff]
    %v200 = vld [vmem:[#allocation2 + $0x388] sm:$0xff]
    %v201 = vld [vmem:[#allocation2 + $0x390] sm:$0xff]
    %v202 = vld [vmem:[#allocation2 + $0x398] sm:$0xff]
    %v203 = vld [vmem:[#allocation2 + $0x3a0] sm:$0xff]
    %v204 = vld [vmem:[#allocation2 + $0x3a8] sm:$0xff]
    %v205 = vld [vmem:[#allocation2 + $0x3b0] sm:$0xff]
    %v206 = vld [vmem:[#allocation2 + $0x3b8] sm:$0xff]
    %v207 = vld [vmem:[#allocation2 + $0x3c0] sm:$0xff]
    %v208 = vld [vmem:[#allocation2 + $0x3c8] sm:$0xff]
    %v209 = vld [vmem:[#allocation2 + $0x3d0] sm:$0xff]
    %v210 = vld [vmem:[#allocation2 + $0x3d8] sm:$0xff]
    %v211 = vld [vmem:[#allocation2 + $0x3e0] sm:$0xff]
    %v212 = vld [vmem:[#allocation2 + $0x3e8] sm:$0xff]
    %v213 = vld [vmem:[#allocation2 + $0x3f0] sm:$0xff]
    %v214 = vld [vmem:[#allocation2 + $0x3f8] sm:$0xff]
    %v215 = vmul.f32 %v43, %v43
    %v216 = vmul.f32 %v44, %v44
    %v217 = vmul.f32 %v45, %v45
    %v219 = vlaneseq
    %v220 = vshrl.u32 %v219, 7
    %v221 = vsub.s32 0, %v220
    %v222 = vrot.slane %v48, %v221
    %v224 = vmul.f32 %v215, %v222
    %v225 = vmul.f32 %v216, %v222
    %v226 = vmul.f32 %v217, %v222
    %vm227 = vcmask 523266
    %v228 = vsel %vm227, %v224, 0.0
    %229 = vadd.xlane.f32.xlu0 %v228
    %v230 = vpop.xlane.xlu0 %229
    %vm231 = vcmask 523264
    %v232 = vsel %vm231, %v225, 0.0
    %233 = vadd.xlane.f32.xlu0 %v232
    %v234 = vpop.xlane.xlu0 %233
    %vm235 = vcmask 517120
    %v236 = vsel %vm235, %v226, 0.0
    %237 = vadd.xlane.f32.xlu0 %v236
    %v238 = vpop.xlane.xlu0 %237
    %v239 = vrsqrt.pop %v230
    %v240 = vmul.f32 %v230, %v239
    %vm241 = vcmp.eq.f32.partialorder %v230, inf
    %v242 = vsel %vm241, %v230, %v240
    %vm243 = vcmp.eq.f32.partialorder %v230, 0.0
    %v244 = vand.u32 %v230, 2147483648
    %v245 = vsel %vm243, %v244, %v242
    %v246 = vrsqrt.pop %v234
    %v247 = vmul.f32 %v234, %v246
    %vm248 = vcmp.eq.f32.partialorder %v234, inf
    %v249 = vsel %vm248, %v234, %v247
    %vm250 = vcmp.eq.f32.partialorder %v234, 0.0
    %v251 = vand.u32 %v234, 2147483648
    %v252 = vsel %vm250, %v251, %v249
    %v253 = vrsqrt.pop %v238
    %v254 = vmul.f32 %v238, %v253
    %vm255 = vcmp.eq.f32.partialorder %v238, inf
    %v256 = vsel %vm255, %v238, %v254
    %vm257 = vcmp.eq.f32.partialorder %v238, 0.0
    %v258 = vand.u32 %v238, 2147483648
    %v259 = vsel %vm257, %v258, %v256
    %vm260 = vcmask 7170
    %261 = vst.msk [vmem:[%s7 - $0x2] sm:$0xfc] %vm260, %v245
    %vm262 = vcmask 7168
    %263 = vst.msk [vmem:[%s7 + $0x6] sm:$0xff] %vm262, %v252
    %vm264 = vcmask 1024
    %265 = vst.msk [vmem:[%s7 + $0xe] sm:$0x3] %vm264, %v259
    %vm269 = vcmask 1046528
    %v270 = vrot.slane %v43, 1
    %v271 = vrot.slane %v44, 1
    %v272 = vsel %vm269, %v270, %v271
    %v273 = vrot.slane %v45, 1
    %v274 = vsel %vm269, %v271, %v273
    %v275 = vsel %vm231, %v272, 0
    %v277 = vsel %vm231, %v274, 0
    %v279 = vsel %vm231, %v273, 0
    %281 = vmatprep.subr.mxu0 0.0
    %282 = vmatpush1.msra.mxu0 0.0
    %283 = vmatprep.subr.mxu0 0.0
    %284 = vmatpush1.msra.mxu0 0.0
    %285 = vmatprep.subr.mxu0 0.0
    %286 = vmatpush1.msra.mxu0 0.0
    %287 = vmatprep.subr.mxu0 0.0
    %288 = vmatpush1.msra.mxu0 0.0
    %289 = vmatprep.subr.mxu0 0.0
    %290 = vmatpush1.msra.mxu0 0.0
    %291 = vmatprep.subr.mxu0 0.0
    %292 = vmatpush1.msra.mxu0 0.0
    %293 = vmatprep.subr.mxu0 0.0
    %294 = vmatpush1.msra.mxu0 0.0
    %295 = vmatprep.subr.mxu0 0.0
    %296 = vmatpush1.msra.mxu0 0.0
    %297 = vmatprep.subr.mxu0 %v148
    %298 = vmatpush1.msra.mxu0 %v147
    %299 = vmatprep.subr.mxu0 %v144
    %300 = vmatpush1.msra.mxu0 %v143
    %301 = vmatprep.subr.mxu0 %v140
    %302 = vmatpush1.msra.mxu0 %v139
    %303 = vmatprep.subr.mxu0 %v136
    %304 = vmatpush1.msra.mxu0 %v135
    %305 = vmatprep.subr.mxu0 %v132
    %306 = vmatpush1.msra.mxu0 %v131
    %307 = vmatprep.subr.mxu0 %v128
    %308 = vmatpush1.msra.mxu0 %v127
    %309 = vmatprep.subr.mxu0 %v124
    %310 = vmatpush1.msra.mxu0 %v123
    %311 = vmatprep.subr.mxu0 %v120
    %312 = vmatpush1.msra.mxu0 %v119
    %313 = vmatprep.subr.mxu0 0.0
    %314 = vmatpush2.msra.mxu0 0.0
    %315 = vmatprep.subr.mxu0 0.0
    %316 = vmatpush2.msra.mxu0 0.0
    %317 = vmatprep.subr.mxu0 0.0
    %318 = vmatpush2.msra.mxu0 0.0
    %319 = vmatprep.subr.mxu0 0.0
    %320 = vmatpush2.msra.mxu0 0.0
    %321 = vmatprep.subr.mxu0 0.0
    %322 = vmatpush2.msra.mxu0 0.0
    %323 = vmatprep.subr.mxu0 0.0
    %324 = vmatpush2.msra.mxu0 0.0
    %325 = vmatprep.subr.mxu0 0.0
    %326 = vmatpush2.msra.mxu0 0.0
    %327 = vmatprep.subr.mxu0 0.0
    %328 = vmatpush2.msra.mxu0 0.0
    %329 = vmatprep.subr.mxu0 0.0
    %330 = vmatpush2.msra.mxu0 0.0
    %331 = vmatprep.subr.mxu0 0.0
    %332 = vmatpush2.msra.mxu0 0.0
    %333 = vmatprep.subr.mxu0 0.0
    %334 = vmatpush2.msra.mxu0 0.0
    %335 = vmatprep.subr.mxu0 0.0
    %336 = vmatpush2.msra.mxu0 0.0
    %337 = vmatprep.subr.mxu0 0.0
    %338 = vmatpush2.msra.mxu0 0.0
    %339 = vmatprep.subr.mxu0 0.0
    %340 = vmatpush2.msra.mxu0 0.0
    %341 = vmatprep.subr.mxu0 0.0
    %342 = vmatpush2.msra.mxu0 0.0
    %343 = vmatprep.subr.mxu0 0.0
    %344 = vmatpush2.msra.mxu0 0.0
    %345 = vmatprep.mubr.f32.mxu0 0.0
    %346 = vmatmul.mubr.f32.gmra.mxu0 %v275
    %v347 = vpop.f32.mrf.mxu0
    %v348 = vadd.f32 0.0, %v347
    %v349 = vpop.f32.mrf.mxu0
    %v350 = vadd.f32 0.0, %v349
    %351 = vmatprep.mubr.f32.mxu0 0.0
    %352 = vmatmul.mubr.f32.gmra.mxu0 %v277
    %v353 = vpop.f32.mrf.mxu0
    %v354 = vadd.f32 0.0, %v353
    %v355 = vpop.f32.mrf.mxu0
    %v356 = vadd.f32 0.0, %v355
    %357 = vmatprep.mubr.f32.mxu0 0.0
    %358 = vmatmul.mubr.f32.gmra.mxu0 %v279
    %v359 = vpop.f32.mrf.mxu0
    %v360 = vadd.f32 0.0, %v359
    %v361 = vpop.f32.mrf.mxu0
    %v362 = vadd.f32 0.0, %v361
    %363 = vdwg.mxu0
    %364 = vmatprep.subr.mxu0 0.0
    %365 = vmatpush1.msra.mxu0 0.0
    %366 = vmatprep.subr.mxu0 0.0
    %367 = vmatpush1.msra.mxu0 0.0
    %368 = vmatprep.subr.mxu0 0.0
    %369 = vmatpush1.msra.mxu0 0.0
    %370 = vmatprep.subr.mxu0 0.0
    %371 = vmatpush1.msra.mxu0 0.0
    %372 = vmatprep.subr.mxu0 0.0
    %373 = vmatpush1.msra.mxu0 0.0
    %374 = vmatprep.subr.mxu0 0.0
    %375 = vmatpush1.msra.mxu0 0.0
    %376 = vmatprep.subr.mxu0 0.0
    %377 = vmatpush1.msra.mxu0 0.0
    %378 = vmatprep.subr.mxu0 0.0
    %379 = vmatpush1.msra.mxu0 0.0
    %380 = vmatprep.subr.mxu0 %v150
    %381 = vmatpush1.msra.mxu0 %v149
    %382 = vmatprep.subr.mxu0 %v146
    %383 = vmatpush1.msra.mxu0 %v145
    %384 = vmatprep.subr.mxu0 %v142
    %385 = vmatpush1.msra.mxu0 %v141
    %386 = vmatprep.subr.mxu0 %v138
    %387 = vmatpush1.msra.mxu0 %v137
    %388 = vmatprep.subr.mxu0 %v134
    %389 = vmatpush1.msra.mxu0 %v133
    %390 = vmatprep.subr.mxu0 %v130
    %391 = vmatpush1.msra.mxu0 %v129
    %392 = vmatprep.subr.mxu0 %v126
    %393 = vmatpush1.msra.mxu0 %v125
    %394 = vmatprep.subr.mxu0 %v122
    %395 = vmatpush1.msra.mxu0 %v121
    %396 = vmatprep.subr.mxu0 0.0
    %397 = vmatpush2.msra.mxu0 0.0
    %398 = vmatprep.subr.mxu0 0.0
    %399 = vmatpush2.msra.mxu0 0.0
    %400 = vmatprep.subr.mxu0 0.0
    %401 = vmatpush2.msra.mxu0 0.0
    %402 = vmatprep.subr.mxu0 0.0
    %403 = vmatpush2.msra.mxu0 0.0
    %404 = vmatprep.subr.mxu0 0.0
    %405 = vmatpush2.msra.mxu0 0.0
    %406 = vmatprep.subr.mxu0 0.0
    %407 = vmatpush2.msra.mxu0 0.0
    %408 = vmatprep.subr.mxu0 0.0
    %409 = vmatpush2.msra.mxu0 0.0
    %410 = vmatprep.subr.mxu0 0.0
    %411 = vmatpush2.msra.mxu0 0.0
    %412 = vmatprep.subr.mxu0 0.0
    %413 = vmatpush2.msra.mxu0 0.0
    %414 = vmatprep.subr.mxu0 0.0
    %415 = vmatpush2.msra.mxu0 0.0
    %416 = vmatprep.subr.mxu0 0.0
    %417 = vmatpush2.msra.mxu0 0.0
    %418 = vmatprep.subr.mxu0 0.0
    %419 = vmatpush2.msra.mxu0 0.0
    %420 = vmatprep.subr.mxu0 0.0
    %421 = vmatpush2.msra.mxu0 0.0
    %422 = vmatprep.subr.mxu0 0.0
    %423 = vmatpush2.msra.mxu0 0.0
    %424 = vmatprep.subr.mxu0 0.0
    %425 = vmatpush2.msra.mxu0 0.0
    %426 = vmatprep.subr.mxu0 0.0
    %427 = vmatpush2.msra.mxu0 0.0
    %428 = vmatprep.mubr.f32.mxu0 0.0
    %429 = vmatmul.mubr.f32.gmra.mxu0 %v275
    %v430 = vpop.f32.mrf.mxu0
    %v431 = vadd.f32 0.0, %v430
    %v432 = vpop.f32.mrf.mxu0
    %v433 = vadd.f32 0.0, %v432
    %434 = vmatprep.mubr.f32.mxu0 0.0
    %435 = vmatmul.mubr.f32.gmra.mxu0 %v277
    %v436 = vpop.f32.mrf.mxu0
    %v437 = vadd.f32 0.0, %v436
    %v438 = vpop.f32.mrf.mxu0
    %v439 = vadd.f32 0.0, %v438
    %440 = vmatprep.mubr.f32.mxu0 0.0
    %441 = vmatmul.mubr.f32.gmra.mxu0 %v279
    %v442 = vpop.f32.mrf.mxu0
    %v443 = vadd.f32 0.0, %v442
    %v444 = vpop.f32.mrf.mxu0
    %v445 = vadd.f32 0.0, %v444
    %446 = vdwg.mxu0
    %v447 = vsel %vm231, %v43, 0
    %v449 = vsel %vm231, %v44, 0
    %v451 = vsel %vm231, %v45, 0
    %453 = vmatprep.subr.mxu0 0.0
    %454 = vmatpush1.msra.mxu0 0.0
    %455 = vmatprep.subr.mxu0 0.0
    %456 = vmatpush1.msra.mxu0 0.0
    %457 = vmatprep.subr.mxu0 0.0
    %458 = vmatpush1.msra.mxu0 0.0
    %459 = vmatprep.subr.mxu0 0.0
    %460 = vmatpush1.msra.mxu0 0.0
    %461 = vmatprep.subr.mxu0 0.0
    %462 = vmatpush1.msra.mxu0 0.0
    %463 = vmatprep.subr.mxu0 0.0
    %464 = vmatpush1.msra.mxu0 0.0
    %465 = vmatprep.subr.mxu0 0.0
    %466 = vmatpush1.msra.mxu0 0.0
    %467 = vmatprep.subr.mxu0 0.0
    %468 = vmatpush1.msra.mxu0 0.0
    %469 = vmatprep.subr.mxu0 %v116
    %470 = vmatpush1.msra.mxu0 %v115
    %471 = vmatprep.subr.mxu0 %v112
    %472 = vmatpush1.msra.mxu0 %v111
    %473 = vmatprep.subr.mxu0 %v108
    %474 = vmatpush1.msra.mxu0 %v107
    %475 = vmatprep.subr.mxu0 %v104
    %476 = vmatpush1.msra.mxu0 %v103
    %477 = vmatprep.subr.mxu0 %v100
    %478 = vmatpush1.msra.mxu0 %v99
    %479 = vmatprep.subr.mxu0 %v96
    %480 = vmatpush1.msra.mxu0 %v95
    %481 = vmatprep.subr.mxu0 %v92
    %482 = vmatpush1.msra.mxu0 %v91
    %483 = vmatprep.subr.mxu0 %v88
    %484 = vmatpush1.msra.mxu0 %v87
    %485 = vmatprep.subr.mxu0 0.0
    %486 = vmatpush2.msra.mxu0 0.0
    %487 = vmatprep.subr.mxu0 0.0
    %488 = vmatpush2.msra.mxu0 0.0
    %489 = vmatprep.subr.mxu0 0.0
    %490 = vmatpush2.msra.mxu0 0.0
    %491 = vmatprep.subr.mxu0 0.0
    %492 = vmatpush2.msra.mxu0 0.0
    %493 = vmatprep.subr.mxu0 0.0
    %494 = vmatpush2.msra.mxu0 0.0
    %495 = vmatprep.subr.mxu0 0.0
    %496 = vmatpush2.msra.mxu0 0.0
    %497 = vmatprep.subr.mxu0 0.0
    %498 = vmatpush2.msra.mxu0 0.0
    %499 = vmatprep.subr.mxu0 0.0
    %500 = vmatpush2.msra.mxu0 0.0
    %501 = vmatprep.subr.mxu0 0.0
    %502 = vmatpush2.msra.mxu0 0.0
    %503 = vmatprep.subr.mxu0 0.0
    %504 = vmatpush2.msra.mxu0 0.0
    %505 = vmatprep.subr.mxu0 0.0
    %506 = vmatpush2.msra.mxu0 0.0
    %507 = vmatprep.subr.mxu0 0.0
    %508 = vmatpush2.msra.mxu0 0.0
    %509 = vmatprep.subr.mxu0 0.0
    %510 = vmatpush2.msra.mxu0 0.0
    %511 = vmatprep.subr.mxu0 0.0
    %512 = vmatpush2.msra.mxu0 0.0
    %513 = vmatprep.subr.mxu0 0.0
    %514 = vmatpush2.msra.mxu0 0.0
    %515 = vmatprep.subr.mxu0 0.0
    %516 = vmatpush2.msra.mxu0 0.0
    %517 = vmatprep.mubr.f32.mxu0 0.0
    %518 = vmatmul.mubr.f32.gmra.mxu0 %v447
    %v519 = vpop.f32.mrf.mxu0
    %v520 = vadd.f32 %v348, %v519
    %v521 = vpop.f32.mrf.mxu0
    %v522 = vadd.f32 %v350, %v521
    %523 = vmatprep.mubr.f32.mxu0 0.0
    %524 = vmatmul.mubr.f32.gmra.mxu0 %v449
    %v525 = vpop.f32.mrf.mxu0
    %v526 = vadd.f32 %v354, %v525
    %v527 = vpop.f32.mrf.mxu0
    %v528 = vadd.f32 %v356, %v527
    %529 = vmatprep.mubr.f32.mxu0 0.0
    %530 = vmatmul.mubr.f32.gmra.mxu0 %v451
    %v531 = vpop.f32.mrf.mxu0
    %v532 = vadd.f32 %v360, %v531
    %v533 = vpop.f32.mrf.mxu0
    %v534 = vadd.f32 %v362, %v533
    %535 = vdwg.mxu0
    %536 = vmatprep.subr.mxu0 0.0
    %537 = vmatpush1.msra.mxu0 0.0
    %538 = vmatprep.subr.mxu0 0.0
    %539 = vmatpush1.msra.mxu0 0.0
    %540 = vmatprep.subr.mxu0 0.0
    %541 = vmatpush1.msra.mxu0 0.0
    %542 = vmatprep.subr.mxu0 0.0
    %543 = vmatpush1.msra.mxu0 0.0
    %544 = vmatprep.subr.mxu0 0.0
    %545 = vmatpush1.msra.mxu0 0.0
    %546 = vmatprep.subr.mxu0 0.0
    %547 = vmatpush1.msra.mxu0 0.0
    %548 = vmatprep.subr.mxu0 0.0
    %549 = vmatpush1.msra.mxu0 0.0
    %550 = vmatprep.subr.mxu0 0.0
    %551 = vmatpush1.msra.mxu0 0.0
    %552 = vmatprep.subr.mxu0 %v118
    %553 = vmatpush1.msra.mxu0 %v117
    %554 = vmatprep.subr.mxu0 %v114
    %555 = vmatpush1.msra.mxu0 %v113
    %556 = vmatprep.subr.mxu0 %v110
    %557 = vmatpush1.msra.mxu0 %v109
    %558 = vmatprep.subr.mxu0 %v106
    %559 = vmatpush1.msra.mxu0 %v105
    %560 = vmatprep.subr.mxu0 %v102
    %561 = vmatpush1.msra.mxu0 %v101
    %562 = vmatprep.subr.mxu0 %v98
    %563 = vmatpush1.msra.mxu0 %v97
    %564 = vmatprep.subr.mxu0 %v94
    %565 = vmatpush1.msra.mxu0 %v93
    %566 = vmatprep.subr.mxu0 %v90
    %567 = vmatpush1.msra.mxu0 %v89
    %568 = vmatprep.subr.mxu0 0.0
    %569 = vmatpush2.msra.mxu0 0.0
    %570 = vmatprep.subr.mxu0 0.0
    %571 = vmatpush2.msra.mxu0 0.0
    %572 = vmatprep.subr.mxu0 0.0
    %573 = vmatpush2.msra.mxu0 0.0
    %574 = vmatprep.subr.mxu0 0.0
    %575 = vmatpush2.msra.mxu0 0.0
    %576 = vmatprep.subr.mxu0 0.0
    %577 = vmatpush2.msra.mxu0 0.0
    %578 = vmatprep.subr.mxu0 0.0
    %579 = vmatpush2.msra.mxu0 0.0
    %580 = vmatprep.subr.mxu0 0.0
    %581 = vmatpush2.msra.mxu0 0.0
    %582 = vmatprep.subr.mxu0 0.0
    %583 = vmatpush2.msra.mxu0 0.0
    %584 = vmatprep.subr.mxu0 0.0
    %585 = vmatpush2.msra.mxu0 0.0
    %586 = vmatprep.subr.mxu0 0.0
    %587 = vmatpush2.msra.mxu0 0.0
    %588 = vmatprep.subr.mxu0 0.0
    %589 = vmatpush2.msra.mxu0 0.0
    %590 = vmatprep.subr.mxu0 0.0
    %591 = vmatpush2.msra.mxu0 0.0
    %592 = vmatprep.subr.mxu0 0.0
    %593 = vmatpush2.msra.mxu0 0.0
    %594 = vmatprep.subr.mxu0 0.0
    %595 = vmatpush2.msra.mxu0 0.0
    %596 = vmatprep.subr.mxu0 0.0
    %597 = vmatpush2.msra.mxu0 0.0
    %598 = vmatprep.subr.mxu0 0.0
    %599 = vmatpush2.msra.mxu0 0.0
    %600 = vmatprep.mubr.f32.mxu0 0.0
    %601 = vmatmul.mubr.f32.gmra.mxu0 %v447
    %v602 = vpop.f32.mrf.mxu0
    %v603 = vadd.f32 %v431, %v602
    %v604 = vpop.f32.mrf.mxu0
    %v605 = vadd.f32 %v433, %v604
    %606 = vmatprep.mubr.f32.mxu0 0.0
    %607 = vmatmul.mubr.f32.gmra.mxu0 %v449
    %v608 = vpop.f32.mrf.mxu0
    %v609 = vadd.f32 %v437, %v608
    %v610 = vpop.f32.mrf.mxu0
    %v611 = vadd.f32 %v439, %v610
    %612 = vmatprep.mubr.f32.mxu0 0.0
    %613 = vmatmul.mubr.f32.gmra.mxu0 %v451
    %v614 = vpop.f32.mrf.mxu0
    %v615 = vadd.f32 %v443, %v614
    %v616 = vpop.f32.mrf.mxu0
    %v617 = vadd.f32 %v445, %v616
    %618 = vdwg.mxu0
    %vm619 = vcmask 1045504
    %v620 = vrot.slane %v43, 2
    %v621 = vrot.slane %v44, 2
    %v622 = vsel %vm619, %v620, %v621
    %v623 = vrot.slane %v45, 2
    %v624 = vsel %vm619, %v621, %v623
    %v625 = vsel %vm231, %v622, 0
    %v627 = vsel %vm231, %v624, 0
    %v629 = vsel %vm231, %v623, 0
    %631 = vmatprep.subr.mxu0 0.0
    %632 = vmatpush1.msra.mxu0 0.0
    %633 = vmatprep.subr.mxu0 0.0
    %634 = vmatpush1.msra.mxu0 0.0
    %635 = vmatprep.subr.mxu0 0.0
    %636 = vmatpush1.msra.mxu0 0.0
    %637 = vmatprep.subr.mxu0 0.0
    %638 = vmatpush1.msra.mxu0 0.0
    %639 = vmatprep.subr.mxu0 0.0
    %640 = vmatpush1.msra.mxu0 0.0
    %641 = vmatprep.subr.mxu0 0.0
    %642 = vmatpush1.msra.mxu0 0.0
    %643 = vmatprep.subr.mxu0 0.0
    %644 = vmatpush1.msra.mxu0 0.0
    %645 = vmatprep.subr.mxu0 0.0
    %646 = vmatpush1.msra.mxu0 0.0
    %647 = vmatprep.subr.mxu0 %v180
    %648 = vmatpush1.msra.mxu0 %v179
    %649 = vmatprep.subr.mxu0 %v176
    %650 = vmatpush1.msra.mxu0 %v175
    %651 = vmatprep.subr.mxu0 %v172
    %652 = vmatpush1.msra.mxu0 %v171
    %653 = vmatprep.subr.mxu0 %v168
    %654 = vmatpush1.msra.mxu0 %v167
    %655 = vmatprep.subr.mxu0 %v164
    %656 = vmatpush1.msra.mxu0 %v163
    %657 = vmatprep.subr.mxu0 %v160
    %658 = vmatpush1.msra.mxu0 %v159
    %659 = vmatprep.subr.mxu0 %v156
    %660 = vmatpush1.msra.mxu0 %v155
    %661 = vmatprep.subr.mxu0 %v152
    %662 = vmatpush1.msra.mxu0 %v151
    %663 = vmatprep.subr.mxu0 0.0
    %664 = vmatpush2.msra.mxu0 0.0
    %665 = vmatprep.subr.mxu0 0.0
    %666 = vmatpush2.msra.mxu0 0.0
    %667 = vmatprep.subr.mxu0 0.0
    %668 = vmatpush2.msra.mxu0 0.0
    %669 = vmatprep.subr.mxu0 0.0
    %670 = vmatpush2.msra.mxu0 0.0
    %671 = vmatprep.subr.mxu0 0.0
    %672 = vmatpush2.msra.mxu0 0.0
    %673 = vmatprep.subr.mxu0 0.0
    %674 = vmatpush2.msra.mxu0 0.0
    %675 = vmatprep.subr.mxu0 0.0
    %676 = vmatpush2.msra.mxu0 0.0
    %677 = vmatprep.subr.mxu0 0.0
    %678 = vmatpush2.msra.mxu0 0.0
    %679 = vmatprep.subr.mxu0 0.0
    %680 = vmatpush2.msra.mxu0 0.0
    %681 = vmatprep.subr.mxu0 0.0
    %682 = vmatpush2.msra.mxu0 0.0
    %683 = vmatprep.subr.mxu0 0.0
    %684 = vmatpush2.msra.mxu0 0.0
    %685 = vmatprep.subr.mxu0 0.0
    %686 = vmatpush2.msra.mxu0 0.0
    %687 = vmatprep.subr.mxu0 0.0
    %688 = vmatpush2.msra.mxu0 0.0
    %689 = vmatprep.subr.mxu0 0.0
    %690 = vmatpush2.msra.mxu0 0.0
    %691 = vmatprep.subr.mxu0 0.0
    %692 = vmatpush2.msra.mxu0 0.0
    %693 = vmatprep.subr.mxu0 0.0
    %694 = vmatpush2.msra.mxu0 0.0
    %695 = vmatprep.mubr.f32.mxu0 0.0
    %696 = vmatmul.mubr.f32.gmra.mxu0 %v625
    %v697 = vpop.f32.mrf.mxu0
    %v698 = vadd.f32 0.0, %v697
    %v699 = vpop.f32.mrf.mxu0
    %v700 = vadd.f32 0.0, %v699
    %701 = vmatprep.mubr.f32.mxu0 0.0
    %702 = vmatmul.mubr.f32.gmra.mxu0 %v627
    %v703 = vpop.f32.mrf.mxu0
    %v704 = vadd.f32 0.0, %v703
    %v705 = vpop.f32.mrf.mxu0
    %v706 = vadd.f32 0.0, %v705
    %707 = vmatprep.mubr.f32.mxu0 0.0
    %708 = vmatmul.mubr.f32.gmra.mxu0 %v629
    %v709 = vpop.f32.mrf.mxu0
    %v710 = vadd.f32 0.0, %v709
    %v711 = vpop.f32.mrf.mxu0
    %v712 = vadd.f32 0.0, %v711
    %713 = vdwg.mxu0
    %714 = vmatprep.subr.mxu0 0.0
    %715 = vmatpush1.msra.mxu0 0.0
    %716 = vmatprep.subr.mxu0 0.0
    %717 = vmatpush1.msra.mxu0 0.0
    %718 = vmatprep.subr.mxu0 0.0
    %719 = vmatpush1.msra.mxu0 0.0
    %720 = vmatprep.subr.mxu0 0.0
    %721 = vmatpush1.msra.mxu0 0.0
    %722 = vmatprep.subr.mxu0 0.0
    %723 = vmatpush1.msra.mxu0 0.0
    %724 = vmatprep.subr.mxu0 0.0
    %725 = vmatpush1.msra.mxu0 0.0
    %726 = vmatprep.subr.mxu0 0.0
    %727 = vmatpush1.msra.mxu0 0.0
    %728 = vmatprep.subr.mxu0 0.0
    %729 = vmatpush1.msra.mxu0 0.0
    %730 = vmatprep.subr.mxu0 %v182
    %731 = vmatpush1.msra.mxu0 %v181
    %732 = vmatprep.subr.mxu0 %v178
    %733 = vmatpush1.msra.mxu0 %v177
    %734 = vmatprep.subr.mxu0 %v174
    %735 = vmatpush1.msra.mxu0 %v173
    %736 = vmatprep.subr.mxu0 %v170
    %737 = vmatpush1.msra.mxu0 %v169
    %738 = vmatprep.subr.mxu0 %v166
    %739 = vmatpush1.msra.mxu0 %v165
    %740 = vmatprep.subr.mxu0 %v162
    %741 = vmatpush1.msra.mxu0 %v161
    %742 = vmatprep.subr.mxu0 %v158
    %743 = vmatpush1.msra.mxu0 %v157
    %744 = vmatprep.subr.mxu0 %v154
    %745 = vmatpush1.msra.mxu0 %v153
    %746 = vmatprep.subr.mxu0 0.0
    %747 = vmatpush2.msra.mxu0 0.0
    %748 = vmatprep.subr.mxu0 0.0
    %749 = vmatpush2.msra.mxu0 0.0
    %750 = vmatprep.subr.mxu0 0.0
    %751 = vmatpush2.msra.mxu0 0.0
    %752 = vmatprep.subr.mxu0 0.0
    %753 = vmatpush2.msra.mxu0 0.0
    %754 = vmatprep.subr.mxu0 0.0
    %755 = vmatpush2.msra.mxu0 0.0
    %756 = vmatprep.subr.mxu0 0.0
    %757 = vmatpush2.msra.mxu0 0.0
    %758 = vmatprep.subr.mxu0 0.0
    %759 = vmatpush2.msra.mxu0 0.0
    %760 = vmatprep.subr.mxu0 0.0
    %761 = vmatpush2.msra.mxu0 0.0
    %762 = vmatprep.subr.mxu0 0.0
    %763 = vmatpush2.msra.mxu0 0.0
    %764 = vmatprep.subr.mxu0 0.0
    %765 = vmatpush2.msra.mxu0 0.0
    %766 = vmatprep.subr.mxu0 0.0
    %767 = vmatpush2.msra.mxu0 0.0
    %768 = vmatprep.subr.mxu0 0.0
    %769 = vmatpush2.msra.mxu0 0.0
    %770 = vmatprep.subr.mxu0 0.0
    %771 = vmatpush2.msra.mxu0 0.0
    %772 = vmatprep.subr.mxu0 0.0
    %773 = vmatpush2.msra.mxu0 0.0
    %774 = vmatprep.subr.mxu0 0.0
    %775 = vmatpush2.msra.mxu0 0.0
    %776 = vmatprep.subr.mxu0 0.0
    %777 = vmatpush2.msra.mxu0 0.0
    %778 = vmatprep.mubr.f32.mxu0 0.0
    %779 = vmatmul.mubr.f32.gmra.mxu0 %v625
    %v780 = vpop.f32.mrf.mxu0
    %v781 = vadd.f32 0.0, %v780
    %v782 = vpop.f32.mrf.mxu0
    %v783 = vadd.f32 0.0, %v782
    %784 = vmatprep.mubr.f32.mxu0 0.0
    %785 = vmatmul.mubr.f32.gmra.mxu0 %v627
    %v786 = vpop.f32.mrf.mxu0
    %v787 = vadd.f32 0.0, %v786
    %v788 = vpop.f32.mrf.mxu0
    %v789 = vadd.f32 0.0, %v788
    %790 = vmatprep.mubr.f32.mxu0 0.0
    %791 = vmatmul.mubr.f32.gmra.mxu0 %v629
    %v792 = vpop.f32.mrf.mxu0
    %v793 = vadd.f32 0.0, %v792
    %v794 = vpop.f32.mrf.mxu0
    %v795 = vadd.f32 0.0, %v794
    %796 = vdwg.mxu0
    %v797 = vadd.f32 %v520, %v698
    %v798 = vadd.f32 %v522, %v700
    %v799 = vadd.f32 %v603, %v781
    %v800 = vadd.f32 %v605, %v783
    %v801 = vadd.f32 %v526, %v704
    %v802 = vadd.f32 %v528, %v706
    %v803 = vadd.f32 %v609, %v787
    %v804 = vadd.f32 %v611, %v789
    %v805 = vadd.f32 %v532, %v710
    %v806 = vadd.f32 %v534, %v712
    %v807 = vadd.f32 %v615, %v793
    %v808 = vadd.f32 %v617, %v795
    %vm809 = vcmask 1044480
    %v810 = vrot.slane %v43, 3
    %v811 = vrot.slane %v44, 3
    %v812 = vsel %vm809, %v810, %v811
    %v813 = vrot.slane %v45, 3
    %v814 = vsel %vm809, %v811, %v813
    %v815 = vsel %vm231, %v812, 0
    %v817 = vsel %vm231, %v814, 0
    %v819 = vsel %vm231, %v813, 0
    %821 = vmatprep.subr.mxu0 0.0
    %822 = vmatpush1.msra.mxu0 0.0
    %823 = vmatprep.subr.mxu0 0.0
    %824 = vmatpush1.msra.mxu0 0.0
    %825 = vmatprep.subr.mxu0 0.0
    %826 = vmatpush1.msra.mxu0 0.0
    %827 = vmatprep.subr.mxu0 0.0
    %828 = vmatpush1.msra.mxu0 0.0
    %829 = vmatprep.subr.mxu0 0.0
    %830 = vmatpush1.msra.mxu0 0.0
    %831 = vmatprep.subr.mxu0 0.0
    %832 = vmatpush1.msra.mxu0 0.0
    %833 = vmatprep.subr.mxu0 0.0
    %834 = vmatpush1.msra.mxu0 0.0
    %835 = vmatprep.subr.mxu0 0.0
    %836 = vmatpush1.msra.mxu0 0.0
    %837 = vmatprep.subr.mxu0 %v212
    %838 = vmatpush1.msra.mxu0 %v211
    %839 = vmatprep.subr.mxu0 %v208
    %840 = vmatpush1.msra.mxu0 %v207
    %841 = vmatprep.subr.mxu0 %v204
    %842 = vmatpush1.msra.mxu0 %v203
    %843 = vmatprep.subr.mxu0 %v200
    %844 = vmatpush1.msra.mxu0 %v199
    %845 = vmatprep.subr.mxu0 %v196
    %846 = vmatpush1.msra.mxu0 %v195
    %847 = vmatprep.subr.mxu0 %v192
    %848 = vmatpush1.msra.mxu0 %v191
    %849 = vmatprep.subr.mxu0 %v188
    %850 = vmatpush1.msra.mxu0 %v187
    %851 = vmatprep.subr.mxu0 %v184
    %852 = vmatpush1.msra.mxu0 %v183
    %853 = vmatprep.subr.mxu0 0.0
    %854 = vmatpush2.msra.mxu0 0.0
    %855 = vmatprep.subr.mxu0 0.0
    %856 = vmatpush2.msra.mxu0 0.0
    %857 = vmatprep.subr.mxu0 0.0
    %858 = vmatpush2.msra.mxu0 0.0
    %859 = vmatprep.subr.mxu0 0.0
    %860 = vmatpush2.msra.mxu0 0.0
    %861 = vmatprep.subr.mxu0 0.0
    %862 = vmatpush2.msra.mxu0 0.0
    %863 = vmatprep.subr.mxu0 0.0
    %864 = vmatpush2.msra.mxu0 0.0
    %865 = vmatprep.subr.mxu0 0.0
    %866 = vmatpush2.msra.mxu0 0.0
    %867 = vmatprep.subr.mxu0 0.0
    %868 = vmatpush2.msra.mxu0 0.0
    %869 = vmatprep.subr.mxu0 0.0
    %870 = vmatpush2.msra.mxu0 0.0
    %871 = vmatprep.subr.mxu0 0.0
    %872 = vmatpush2.msra.mxu0 0.0
    %873 = vmatprep.subr.mxu0 0.0
    %874 = vmatpush2.msra.mxu0 0.0
    %875 = vmatprep.subr.mxu0 0.0
    %876 = vmatpush2.msra.mxu0 0.0
    %877 = vmatprep.subr.mxu0 0.0
    %878 = vmatpush2.msra.mxu0 0.0
    %879 = vmatprep.subr.mxu0 0.0
    %880 = vmatpush2.msra.mxu0 0.0
    %881 = vmatprep.subr.mxu0 0.0
    %882 = vmatpush2.msra.mxu0 0.0
    %883 = vmatprep.subr.mxu0 0.0
    %884 = vmatpush2.msra.mxu0 0.0
    %885 = vmatprep.mubr.f32.mxu0 0.0
    %886 = vmatmul.mubr.f32.gmra.mxu0 %v815
    %v887 = vpop.f32.mrf.mxu0
    %v888 = vadd.f32 0.0, %v887
    %v889 = vpop.f32.mrf.mxu0
    %v890 = vadd.f32 0.0, %v889
    %891 = vmatprep.mubr.f32.mxu0 0.0
    %892 = vmatmul.mubr.f32.gmra.mxu0 %v817
    %v893 = vpop.f32.mrf.mxu0
    %v894 = vadd.f32 0.0, %v893
    %v895 = vpop.f32.mrf.mxu0
    %v896 = vadd.f32 0.0, %v895
    %897 = vmatprep.mubr.f32.mxu0 0.0
    %898 = vmatmul.mubr.f32.gmra.mxu0 %v819
    %v899 = vpop.f32.mrf.mxu0
    %v900 = vadd.f32 0.0, %v899
    %v901 = vpop.f32.mrf.mxu0
    %v902 = vadd.f32 0.0, %v901
    %903 = vdwg.mxu0
    %904 = vmatprep.subr.mxu0 0.0
    %905 = vmatpush1.msra.mxu0 0.0
    %906 = vmatprep.subr.mxu0 0.0
    %907 = vmatpush1.msra.mxu0 0.0
    %908 = vmatprep.subr.mxu0 0.0
    %909 = vmatpush1.msra.mxu0 0.0
    %910 = vmatprep.subr.mxu0 0.0
    %911 = vmatpush1.msra.mxu0 0.0
    %912 = vmatprep.subr.mxu0 0.0
    %913 = vmatpush1.msra.mxu0 0.0
    %914 = vmatprep.subr.mxu0 0.0
    %915 = vmatpush1.msra.mxu0 0.0
    %916 = vmatprep.subr.mxu0 0.0
    %917 = vmatpush1.msra.mxu0 0.0
    %918 = vmatprep.subr.mxu0 0.0
    %919 = vmatpush1.msra.mxu0 0.0
    %920 = vmatprep.subr.mxu0 %v214
    %921 = vmatpush1.msra.mxu0 %v213
    %922 = vmatprep.subr.mxu0 %v210
    %923 = vmatpush1.msra.mxu0 %v209
    %924 = vmatprep.subr.mxu0 %v206
    %925 = vmatpush1.msra.mxu0 %v205
    %926 = vmatprep.subr.mxu0 %v202
    %927 = vmatpush1.msra.mxu0 %v201
    %928 = vmatprep.subr.mxu0 %v198
    %929 = vmatpush1.msra.mxu0 %v197
    %930 = vmatprep.subr.mxu0 %v194
    %931 = vmatpush1.msra.mxu0 %v193
    %932 = vmatprep.subr.mxu0 %v190
    %933 = vmatpush1.msra.mxu0 %v189
    %934 = vmatprep.subr.mxu0 %v186
    %935 = vmatpush1.msra.mxu0 %v185
    %936 = vmatprep.subr.mxu0 0.0
    %937 = vmatpush2.msra.mxu0 0.0
    %938 = vmatprep.subr.mxu0 0.0
    %939 = vmatpush2.msra.mxu0 0.0
    %940 = vmatprep.subr.mxu0 0.0
    %941 = vmatpush2.msra.mxu0 0.0
    %942 = vmatprep.subr.mxu0 0.0
    %943 = vmatpush2.msra.mxu0 0.0
    %944 = vmatprep.subr.mxu0 0.0
    %945 = vmatpush2.msra.mxu0 0.0
    %946 = vmatprep.subr.mxu0 0.0
    %947 = vmatpush2.msra.mxu0 0.0
    %948 = vmatprep.subr.mxu0 0.0
    %949 = vmatpush2.msra.mxu0 0.0
    %950 = vmatprep.subr.mxu0 0.0
    %951 = vmatpush2.msra.mxu0 0.0
    %952 = vmatprep.subr.mxu0 0.0
    %953 = vmatpush2.msra.mxu0 0.0
    %954 = vmatprep.subr.mxu0 0.0
    %955 = vmatpush2.msra.mxu0 0.0
    %956 = vmatprep.subr.mxu0 0.0
    %957 = vmatpush2.msra.mxu0 0.0
    %958 = vmatprep.subr.mxu0 0.0
    %959 = vmatpush2.msra.mxu0 0.0
    %960 = vmatprep.subr.mxu0 0.0
    %961 = vmatpush2.msra.mxu0 0.0
    %962 = vmatprep.subr.mxu0 0.0
    %963 = vmatpush2.msra.mxu0 0.0
    %964 = vmatprep.subr.mxu0 0.0
    %965 = vmatpush2.msra.mxu0 0.0
    %966 = vmatprep.subr.mxu0 0.0
    %967 = vmatpush2.msra.mxu0 0.0
    %968 = vmatprep.mubr.f32.mxu0 0.0
    %969 = vmatmul.mubr.f32.gmra.mxu0 %v815
    %v970 = vpop.f32.mrf.mxu0
    %v971 = vadd.f32 0.0, %v970
    %v972 = vpop.f32.mrf.mxu0
    %v973 = vadd.f32 0.0, %v972
    %974 = vmatprep.mubr.f32.mxu0 0.0
    %975 = vmatmul.mubr.f32.gmra.mxu0 %v817
    %v976 = vpop.f32.mrf.mxu0
    %v977 = vadd.f32 0.0, %v976
    %v978 = vpop.f32.mrf.mxu0
    %v979 = vadd.f32 0.0, %v978
    %980 = vmatprep.mubr.f32.mxu0 0.0
    %981 = vmatmul.mubr.f32.gmra.mxu0 %v819
    %v982 = vpop.f32.mrf.mxu0
    %v983 = vadd.f32 0.0, %v982
    %v984 = vpop.f32.mrf.mxu0
    %v985 = vadd.f32 0.0, %v984
    %986 = vdwg.mxu0
    %v987 = vadd.f32 %v797, %v888
    %v988 = vadd.f32 %v798, %v890
    %v989 = vadd.f32 %v799, %v971
    %v990 = vadd.f32 %v800, %v973
    %v991 = vadd.f32 %v801, %v894
    %v992 = vadd.f32 %v802, %v896
    %v993 = vadd.f32 %v803, %v977
    %v994 = vadd.f32 %v804, %v979
    %v995 = vadd.f32 %v805, %v900
    %v996 = vadd.f32 %v806, %v902
    %v997 = vadd.f32 %v807, %v983
    %v998 = vadd.f32 %v808, %v985
    %v999 = vmul.f32 %v987, %v987
    %v1000 = vmul.f32 %v988, %v988
    %v1001 = vmul.f32 %v991, %v991
    %v1002 = vmul.f32 %v992, %v992
    %v1003 = vmul.f32 %v995, %v995
    %v1004 = vmul.f32 %v996, %v996
    %v1005 = vmul.f32 %v989, %v989
    %v1006 = vmul.f32 %v990, %v990
    %v1007 = vmul.f32 %v993, %v993
    %v1008 = vmul.f32 %v994, %v994
    %v1009 = vmul.f32 %v997, %v997
    %v1010 = vmul.f32 %v998, %v998
    %v1011 = vadd.f32 %v999, %v1005
    %v1012 = vadd.f32 %v1000, %v1006
    %v1013 = vadd.f32 %v1001, %v1007
    %v1014 = vadd.f32 %v1002, %v1008
    %v1015 = vadd.f32 %v1003, %v1009
    %v1016 = vadd.f32 %v1004, %v1010
    %1017 = vmatprep.subr.mxu0 0.0
    %1018 = vmatpush1.msra.mxu0 %v66
    %1019 = vmatprep.subr.mxu0 0.0
    %1020 = vmatpush1.msra.mxu0 %v65
    %1021 = vmatprep.subr.mxu0 0.0
    %1022 = vmatpush1.msra.mxu0 %v64
    %1023 = vmatprep.subr.mxu0 0.0
    %1024 = vmatpush1.msra.mxu0 %v63
    %1025 = vmatprep.subr.mxu0 0.0
    %1026 = vmatpush1.msra.mxu0 %v62
    %1027 = vmatprep.subr.mxu0 0.0
    %1028 = vmatpush1.msra.mxu0 %v61
    %1029 = vmatprep.subr.mxu0 0.0
    %1030 = vmatpush1.msra.mxu0 %v60
    %1031 = vmatprep.subr.mxu0 0.0
    %1032 = vmatpush1.msra.mxu0 %v59
    %1033 = vmatprep.subr.mxu0 0.0
    %1034 = vmatpush1.msra.mxu0 %v58
    %1035 = vmatprep.subr.mxu0 0.0
    %1036 = vmatpush1.msra.mxu0 %v57
    %1037 = vmatprep.subr.mxu0 0.0
    %1038 = vmatpush1.msra.mxu0 %v56
    %1039 = vmatprep.subr.mxu0 0.0
    %1040 = vmatpush1.msra.mxu0 %v55
    %1041 = vmatprep.subr.mxu0 0.0
    %1042 = vmatpush1.msra.mxu0 %v54
    %1043 = vmatprep.subr.mxu0 0.0
    %1044 = vmatpush1.msra.mxu0 %v53
    %1045 = vmatprep.subr.mxu0 0.0
    %1046 = vmatpush1.msra.mxu0 %v52
    %1047 = vmatprep.subr.mxu0 0.0
    %1048 = vmatpush1.msra.mxu0 %v51
    %1049 = vmatprep.subr.mxu0 0.0
    %1050 = vmatpush2.msra.mxu0 %v82
    %1051 = vmatprep.subr.mxu0 0.0
    %1052 = vmatpush2.msra.mxu0 %v81
    %1053 = vmatprep.subr.mxu0 0.0
    %1054 = vmatpush2.msra.mxu0 %v80
    %1055 = vmatprep.subr.mxu0 0.0
    %1056 = vmatpush2.msra.mxu0 %v79
    %1057 = vmatprep.subr.mxu0 0.0
    %1058 = vmatpush2.msra.mxu0 %v78
    %1059 = vmatprep.subr.mxu0 0.0
    %1060 = vmatpush2.msra.mxu0 %v77
    %1061 = vmatprep.subr.mxu0 0.0
    %1062 = vmatpush2.msra.mxu0 %v76
    %1063 = vmatprep.subr.mxu0 0.0
    %1064 = vmatpush2.msra.mxu0 %v75
    %1065 = vmatprep.subr.mxu0 0.0
    %1066 = vmatpush2.msra.mxu0 %v74
    %1067 = vmatprep.subr.mxu0 0.0
    %1068 = vmatpush2.msra.mxu0 %v73
    %1069 = vmatprep.subr.mxu0 0.0
    %1070 = vmatpush2.msra.mxu0 %v72
    %1071 = vmatprep.subr.mxu0 0.0
    %1072 = vmatpush2.msra.mxu0 %v71
    %1073 = vmatprep.subr.mxu0 0.0
    %1074 = vmatpush2.msra.mxu0 %v70
    %1075 = vmatprep.subr.mxu0 0.0
    %1076 = vmatpush2.msra.mxu0 %v69
    %1077 = vmatprep.subr.mxu0 0.0
    %1078 = vmatpush2.msra.mxu0 %v68
    %1079 = vmatprep.subr.mxu0 0.0
    %1080 = vmatpush2.msra.mxu0 %v67
    %1081 = vmatprep.mubr.f32.mxu0 %v1012
    %1082 = vmatmul.mubr.f32.gmra.mxu0 %v1011
    %v1083 = vpop.f32.mrf.mxu0
    %v1084 = vadd.f32 1e-06, %v1083
    %v1085 = vpop.f32.mrf.mxu0
    %1086 = vmatprep.mubr.f32.mxu0 %v1014
    %1087 = vmatmul.mubr.f32.gmra.mxu0 %v1013
    %v1088 = vpop.f32.mrf.mxu0
    %v1089 = vadd.f32 1e-06, %v1088
    %v1090 = vpop.f32.mrf.mxu0
    %1091 = vmatprep.mubr.f32.mxu0 %v1016
    %1092 = vmatmul.mubr.f32.gmra.mxu0 %v1015
    %v1093 = vpop.f32.mrf.mxu0
    %v1094 = vadd.f32 1e-06, %v1093
    %v1095 = vpop.f32.mrf.mxu0
    %1096 = vdwg.mxu0
    %v1097 = vlog2.pop %v1084
    %v1098 = vmul.f32 %v1097, 0.6931472
    %v1099 = vlog2.pop %v1089
    %v1100 = vmul.f32 %v1099, 0.6931472
    %v1101 = vlog2.pop %v1094
    %v1102 = vmul.f32 %v1101, 0.6931472
    %vm1103 = vcmask 261120
    %v1105 = vsel %vm1103, %v1098, 0
    %v1108 = vsel %vm1103, %v1100, 0
    %v1111 = vsel %vm1103, %v1102, 0
    %1113 = vmatprep.subr.mxu0 0.0
    %1114 = vmatpush1.msra.mxu0 0.0
    %1115 = vmatprep.subr.mxu0 0.0
    %1116 = vmatpush1.msra.mxu0 0.0
    %1117 = vmatprep.subr.mxu0 0.0
    %1118 = vmatpush1.msra.mxu0 0.0
    %1119 = vmatprep.subr.mxu0 0.0
    %1120 = vmatpush1.msra.mxu0 0.0
    %1121 = vmatprep.subr.mxu0 0.0
    %1122 = vmatpush1.msra.mxu0 0.0
    %1123 = vmatprep.subr.mxu0 0.0
    %1124 = vmatpush1.msra.mxu0 0.0
    %1125 = vmatprep.subr.mxu0 0.0
    %1126 = vmatpush1.msra.mxu0 0.0
    %1127 = vmatprep.subr.mxu0 0.0
    %1128 = vmatpush1.msra.mxu0 0.0
    %1129 = vmatprep.subr.mxu0 0.0
    %1130 = vmatpush1.msra.mxu0 0.0
    %1131 = vmatprep.subr.mxu0 0.0
    %1132 = vmatpush1.msra.mxu0 0.0
    %1133 = vmatprep.subr.mxu0 0.0
    %1134 = vmatpush1.msra.mxu0 0.0
    %1135 = vmatprep.subr.mxu0 0.0
    %1136 = vmatpush1.msra.mxu0 0.0
    %1137 = vmatprep.subr.mxu0 0.0
    %1138 = vmatpush1.msra.mxu0 %v86
    %1139 = vmatprep.subr.mxu0 0.0
    %1140 = vmatpush1.msra.mxu0 %v85
    %1141 = vmatprep.subr.mxu0 0.0
    %1142 = vmatpush1.msra.mxu0 %v84
    %1143 = vmatprep.subr.mxu0 0.0
    %1144 = vmatpush1.msra.mxu0 %v83
    %1145 = vmatprep.subr.mxu0 0.0
    %1146 = vmatpush2.msra.mxu0 0.0
    %1147 = vmatprep.subr.mxu0 0.0
    %1148 = vmatpush2.msra.mxu0 0.0
    %1149 = vmatprep.subr.mxu0 0.0
    %1150 = vmatpush2.msra.mxu0 0.0
    %1151 = vmatprep.subr.mxu0 0.0
    %1152 = vmatpush2.msra.mxu0 0.0
    %1153 = vmatprep.subr.mxu0 0.0
    %1154 = vmatpush2.msra.mxu0 0.0
    %1155 = vmatprep.subr.mxu0 0.0
    %1156 = vmatpush2.msra.mxu0 0.0
    %1157 = vmatprep.subr.mxu0 0.0
    %1158 = vmatpush2.msra.mxu0 0.0
    %1159 = vmatprep.subr.mxu0 0.0
    %1160 = vmatpush2.msra.mxu0 0.0
    %1161 = vmatprep.subr.mxu0 0.0
    %1162 = vmatpush2.msra.mxu0 0.0
    %1163 = vmatprep.subr.mxu0 0.0
    %1164 = vmatpush2.msra.mxu0 0.0
    %1165 = vmatprep.subr.mxu0 0.0
    %1166 = vmatpush2.msra.mxu0 0.0
    %1167 = vmatprep.subr.mxu0 0.0
    %1168 = vmatpush2.msra.mxu0 0.0
    %1169 = vmatprep.subr.mxu0 0.0
    %1170 = vmatpush2.msra.mxu0 0.0
    %1171 = vmatprep.subr.mxu0 0.0
    %1172 = vmatpush2.msra.mxu0 0.0
    %1173 = vmatprep.subr.mxu0 0.0
    %1174 = vmatpush2.msra.mxu0 0.0
    %1175 = vmatprep.subr.mxu0 0.0
    %1176 = vmatpush2.msra.mxu0 0.0
    %1177 = vmatprep.mubr.f32.mxu0 0.0
    %1178 = vmatmul.mubr.f32.gmra.mxu0 %v1105
    %v1179 = vpop.f32.mrf.mxu0
    %v1180 = vadd.f32 0.0, %v1179
    %v1181 = vpop.f32.mrf.mxu0
    %1182 = vmatprep.mubr.f32.mxu0 0.0
    %1183 = vmatmul.mubr.f32.gmra.mxu0 %v1108
    %v1184 = vpop.f32.mrf.mxu0
    %v1185 = vadd.f32 0.0, %v1184
    %v1186 = vpop.f32.mrf.mxu0
    %1187 = vmatprep.mubr.f32.mxu0 0.0
    %1188 = vmatmul.mubr.f32.gmra.mxu0 %v1111
    %v1189 = vpop.f32.mrf.mxu0
    %v1190 = vpop.f32.mrf.mxu0
    %1191 = vdwg.mxu0
    %vm1192 = vcmask 130048
    %v1193 = vsel %vm1192, %v1180, 0.0
    %v1194 = vsel %vm1192, %v1185, 0.0
    %v1195 = vadd.f32 %v1193, %v1194
    %v1196 = vrot.slane %v1195, 4
    %v1197 = vadd.f32 %v1195, %v1196
    %v1198 = vrot.slane %v1197, 2
    %v1199 = vadd.f32 %v1197, %v1198
    %v1200 = vrot.slane %v1199, 1
    %v1201 = vadd.f32 %v1199, %v1200
    %v1202 = vrcp.pop 16.0
    %v1203 = vmul.f32 %v1201, %v1202
    %v1204 = vsub.f32 %v1180, %v1203
    %v1205 = vsub.f32 %v1185, %v1203
    %v1206 = vmul.f32 %v1204, %v1204
    %v1207 = vmul.f32 %v1205, %v1205
    %v1208 = vsel %vm1192, %v1206, 0.0
    %v1209 = vsel %vm1192, %v1207, 0.0
    %v1210 = vadd.f32 %v1208, %v1209
    %v1211 = vrot.slane %v1210, 4
    %v1212 = vadd.f32 %v1210, %v1211
    %v1213 = vrot.slane %v1212, 2
    %v1214 = vadd.f32 %v1212, %v1213
    %v1215 = vrot.slane %v1214, 1
    %v1216 = vadd.f32 %v1214, %v1215
    %v1217 = vmul.f32 %v1216, %v1202
    %v1218 = vadd.f32 %v1217, 1e-05
    %v1219 = vrsqrt.pop %v1218
    %v1220 = vmul.f32 %v1204, %v1219
    %v1221 = vmul.f32 %v1205, %v1219
    %v1223 = vlaneseq
    %v1224 = vshrl.u32 %v1223, 7
    %v1225 = vsub.s32 0, %v1224
    %v1226 = vrot.slane %v49, %v1225
    %v1228 = vmul.f32 %v1220, %v1226
    %v1229 = vmul.f32 %v1221, %v1226
    %v1231 = vlaneseq
    %v1232 = vshrl.u32 %v1231, 7
    %v1233 = vsub.s32 0, %v1232
    %v1234 = vrot.slane %v50, %v1233
    %v1236 = vadd.f32 %v1228, %v1234
    %v1237 = vadd.f32 %v1229, %v1234
    %1238 = vst.msk [vmem:[#allocation5] sm:$0xff] %vm1192, %v1236
    %1239 = vst.msk [vmem:[#allocation5 + $0x8] sm:$0xff] %vm1192, %v1237
    %v1240 = vmul.f32 %v46, %v46
    %v1241 = vmul.f32 %v47, %v47
    %v1242 = vmul.f32 %v1240, %v222
    %v1243 = vmul.f32 %v1241, %v222
    %vm1244 = vcmask 523270
    %v1245 = vsel %vm1244, %v226, 0.0
    %1246 = vadd.xlane.f32.xlu0 %v1245
    %v1247 = vpop.xlane.xlu0 %1246
    %v1248 = vsel %vm231, %v1242, 0.0
    %1249 = vadd.xlane.f32.xlu0 %v1248
    %v1250 = vpop.xlane.xlu0 %1249
    %vm1251 = vcmask 521216
    %v1252 = vsel %vm1251, %v1243, 0.0
    %1253 = vadd.xlane.f32.xlu0 %v1252
    %v1254 = vpop.xlane.xlu0 %1253
    %v1255 = vrsqrt.pop %v1247
    %v1256 = vmul.f32 %v1247, %v1255
    %vm1257 = vcmp.eq.f32.partialorder %v1247, inf
    %v1258 = vsel %vm1257, %v1247, %v1256
    %vm1259 = vcmp.eq.f32.partialorder %v1247, 0.0
    %v1260 = vand.u32 %v1247, 2147483648
    %v1261 = vsel %vm1259, %v1260, %v1258
    %v1262 = vrsqrt.pop %v1250
    %v1263 = vmul.f32 %v1250, %v1262
    %vm1264 = vcmp.eq.f32.partialorder %v1250, inf
    %v1265 = vsel %vm1264, %v1250, %v1263
    %vm1266 = vcmp.eq.f32.partialorder %v1250, 0.0
    %v1267 = vand.u32 %v1250, 2147483648
    %v1268 = vsel %vm1266, %v1267, %v1265
    %v1269 = vrsqrt.pop %v1254
    %v1270 = vmul.f32 %v1254, %v1269
    %vm1271 = vcmp.eq.f32.partialorder %v1254, inf
    %v1272 = vsel %vm1271, %v1254, %v1270
    %vm1273 = vcmp.eq.f32.partialorder %v1254, 0.0
    %v1274 = vand.u32 %v1254, 2147483648
    %v1275 = vsel %vm1273, %v1274, %v1272
    %vm1276 = vcmask 15374
    %1277 = vst.msk [vmem:[%s7 - $0x6] sm:$0xc0] %vm1276, %v1261
    %vm1278 = vcmask 15368
    %1279 = vst.msk [vmem:[%s7 + $0x2] sm:$0xff] %vm1278, %v1268
    %vm1280 = vcmask 13320
    %1281 = vst.msk [vmem:[%s7 + $0xa] sm:$0x3f] %vm1280, %v1275
    %vm1284 = vcmask 1042432
    %v1285 = vrot.slane %v45, 5
    %v1286 = vrot.slane %v46, 5
    %v1287 = vsel %vm1284, %v1285, %v1286
    %v1288 = vrot.slane %v47, 5
    %v1289 = vsel %vm1284, %v1286, %v1288
    %v1290 = vsel %vm231, %v1287, 0
    %v1292 = vsel %vm231, %v1289, 0
    %v1294 = vsel %vm231, %v1288, 0
    %1296 = vmatprep.subr.mxu0 0.0
    %1297 = vmatpush1.msra.mxu0 0.0
    %1298 = vmatprep.subr.mxu0 0.0
    %1299 = vmatpush1.msra.mxu0 0.0
    %1300 = vmatprep.subr.mxu0 0.0
    %1301 = vmatpush1.msra.mxu0 0.0
    %1302 = vmatprep.subr.mxu0 0.0
    %1303 = vmatpush1.msra.mxu0 0.0
    %1304 = vmatprep.subr.mxu0 0.0
    %1305 = vmatpush1.msra.mxu0 0.0
    %1306 = vmatprep.subr.mxu0 0.0
    %1307 = vmatpush1.msra.mxu0 0.0
    %1308 = vmatprep.subr.mxu0 0.0
    %1309 = vmatpush1.msra.mxu0 0.0
    %1310 = vmatprep.subr.mxu0 0.0
    %1311 = vmatpush1.msra.mxu0 0.0
    %1312 = vmatprep.subr.mxu0 %v148
    %1313 = vmatpush1.msra.mxu0 %v147
    %1314 = vmatprep.subr.mxu0 %v144
    %1315 = vmatpush1.msra.mxu0 %v143
    %1316 = vmatprep.subr.mxu0 %v140
    %1317 = vmatpush1.msra.mxu0 %v139
    %1318 = vmatprep.subr.mxu0 %v136
    %1319 = vmatpush1.msra.mxu0 %v135
    %1320 = vmatprep.subr.mxu0 %v132
    %1321 = vmatpush1.msra.mxu0 %v131
    %1322 = vmatprep.subr.mxu0 %v128
    %1323 = vmatpush1.msra.mxu0 %v127
    %1324 = vmatprep.subr.mxu0 %v124
    %1325 = vmatpush1.msra.mxu0 %v123
    %1326 = vmatprep.subr.mxu0 %v120
    %1327 = vmatpush1.msra.mxu0 %v119
    %1328 = vmatprep.subr.mxu0 0.0
    %1329 = vmatpush2.msra.mxu0 0.0
    %1330 = vmatprep.subr.mxu0 0.0
    %1331 = vmatpush2.msra.mxu0 0.0
    %1332 = vmatprep.subr.mxu0 0.0
    %1333 = vmatpush2.msra.mxu0 0.0
    %1334 = vmatprep.subr.mxu0 0.0
    %1335 = vmatpush2.msra.mxu0 0.0
    %1336 = vmatprep.subr.mxu0 0.0
    %1337 = vmatpush2.msra.mxu0 0.0
    %1338 = vmatprep.subr.mxu0 0.0
    %1339 = vmatpush2.msra.mxu0 0.0
    %1340 = vmatprep.subr.mxu0 0.0
    %1341 = vmatpush2.msra.mxu0 0.0
    %1342 = vmatprep.subr.mxu0 0.0
    %1343 = vmatpush2.msra.mxu0 0.0
    %1344 = vmatprep.subr.mxu0 0.0
    %1345 = vmatpush2.msra.mxu0 0.0
    %1346 = vmatprep.subr.mxu0 0.0
    %1347 = vmatpush2.msra.mxu0 0.0
    %1348 = vmatprep.subr.mxu0 0.0
    %1349 = vmatpush2.msra.mxu0 0.0
    %1350 = vmatprep.subr.mxu0 0.0
    %1351 = vmatpush2.msra.mxu0 0.0
    %1352 = vmatprep.subr.mxu0 0.0
    %1353 = vmatpush2.msra.mxu0 0.0
    %1354 = vmatprep.subr.mxu0 0.0
    %1355 = vmatpush2.msra.mxu0 0.0
    %1356 = vmatprep.subr.mxu0 0.0
    %1357 = vmatpush2.msra.mxu0 0.0
    %1358 = vmatprep.subr.mxu0 0.0
    %1359 = vmatpush2.msra.mxu0 0.0
    %1360 = vmatprep.mubr.f32.mxu0 0.0
    %1361 = vmatmul.mubr.f32.gmra.mxu0 %v1290
    %v1362 = vpop.f32.mrf.mxu0
    %v1363 = vadd.f32 0.0, %v1362
    %v1364 = vpop.f32.mrf.mxu0
    %v1365 = vadd.f32 0.0, %v1364
    %1366 = vmatprep.mubr.f32.mxu0 0.0
    %1367 = vmatmul.mubr.f32.gmra.mxu0 %v1292
    %v1368 = vpop.f32.mrf.mxu0
    %v1369 = vadd.f32 0.0, %v1368
    %v1370 = vpop.f32.mrf.mxu0
    %v1371 = vadd.f32 0.0, %v1370
    %1372 = vmatprep.mubr.f32.mxu0 0.0
    %1373 = vmatmul.mubr.f32.gmra.mxu0 %v1294
    %v1374 = vpop.f32.mrf.mxu0
    %v1375 = vadd.f32 0.0, %v1374
    %v1376 = vpop.f32.mrf.mxu0
    %v1377 = vadd.f32 0.0, %v1376
    %1378 = vdwg.mxu0
    %1379 = vmatprep.subr.mxu0 0.0
    %1380 = vmatpush1.msra.mxu0 0.0
    %1381 = vmatprep.subr.mxu0 0.0
    %1382 = vmatpush1.msra.mxu0 0.0
    %1383 = vmatprep.subr.mxu0 0.0
    %1384 = vmatpush1.msra.mxu0 0.0
    %1385 = vmatprep.subr.mxu0 0.0
    %1386 = vmatpush1.msra.mxu0 0.0
    %1387 = vmatprep.subr.mxu0 0.0
    %1388 = vmatpush1.msra.mxu0 0.0
    %1389 = vmatprep.subr.mxu0 0.0
    %1390 = vmatpush1.msra.mxu0 0.0
    %1391 = vmatprep.subr.mxu0 0.0
    %1392 = vmatpush1.msra.mxu0 0.0
    %1393 = vmatprep.subr.mxu0 0.0
    %1394 = vmatpush1.msra.mxu0 0.0
    %1395 = vmatprep.subr.mxu0 %v150
    %1396 = vmatpush1.msra.mxu0 %v149
    %1397 = vmatprep.subr.mxu0 %v146
    %1398 = vmatpush1.msra.mxu0 %v145
    %1399 = vmatprep.subr.mxu0 %v142
    %1400 = vmatpush1.msra.mxu0 %v141
    %1401 = vmatprep.subr.mxu0 %v138
    %1402 = vmatpush1.msra.mxu0 %v137
    %1403 = vmatprep.subr.mxu0 %v134
    %1404 = vmatpush1.msra.mxu0 %v133
    %1405 = vmatprep.subr.mxu0 %v130
    %1406 = vmatpush1.msra.mxu0 %v129
    %1407 = vmatprep.subr.mxu0 %v126
    %1408 = vmatpush1.msra.mxu0 %v125
    %1409 = vmatprep.subr.mxu0 %v122
    %1410 = vmatpush1.msra.mxu0 %v121
    %1411 = vmatprep.subr.mxu0 0.0
    %1412 = vmatpush2.msra.mxu0 0.0
    %1413 = vmatprep.subr.mxu0 0.0
    %1414 = vmatpush2.msra.mxu0 0.0
    %1415 = vmatprep.subr.mxu0 0.0
    %1416 = vmatpush2.msra.mxu0 0.0
    %1417 = vmatprep.subr.mxu0 0.0
    %1418 = vmatpush2.msra.mxu0 0.0
    %1419 = vmatprep.subr.mxu0 0.0
    %1420 = vmatpush2.msra.mxu0 0.0
    %1421 = vmatprep.subr.mxu0 0.0
    %1422 = vmatpush2.msra.mxu0 0.0
    %1423 = vmatprep.subr.mxu0 0.0
    %1424 = vmatpush2.msra.mxu0 0.0
    %1425 = vmatprep.subr.mxu0 0.0
    %1426 = vmatpush2.msra.mxu0 0.0
    %1427 = vmatprep.subr.mxu0 0.0
    %1428 = vmatpush2.msra.mxu0 0.0
    %1429 = vmatprep.subr.mxu0 0.0
    %1430 = vmatpush2.msra.mxu0 0.0
    %1431 = vmatprep.subr.mxu0 0.0
    %1432 = vmatpush2.msra.mxu0 0.0
    %1433 = vmatprep.subr.mxu0 0.0
    %1434 = vmatpush2.msra.mxu0 0.0
    %1435 = vmatprep.subr.mxu0 0.0
    %1436 = vmatpush2.msra.mxu0 0.0
    %1437 = vmatprep.subr.mxu0 0.0
    %1438 = vmatpush2.msra.mxu0 0.0
    %1439 = vmatprep.subr.mxu0 0.0
    %1440 = vmatpush2.msra.mxu0 0.0
    %1441 = vmatprep.subr.mxu0 0.0
    %1442 = vmatpush2.msra.mxu0 0.0
    %1443 = vmatprep.mubr.f32.mxu0 0.0
    %1444 = vmatmul.mubr.f32.gmra.mxu0 %v1290
    %v1445 = vpop.f32.mrf.mxu0
    %v1446 = vadd.f32 0.0, %v1445
    %v1447 = vpop.f32.mrf.mxu0
    %v1448 = vadd.f32 0.0, %v1447
    %1449 = vmatprep.mubr.f32.mxu0 0.0
    %1450 = vmatmul.mubr.f32.gmra.mxu0 %v1292
    %v1451 = vpop.f32.mrf.mxu0
    %v1452 = vadd.f32 0.0, %v1451
    %v1453 = vpop.f32.mrf.mxu0
    %v1454 = vadd.f32 0.0, %v1453
    %1455 = vmatprep.mubr.f32.mxu0 0.0
    %1456 = vmatmul.mubr.f32.gmra.mxu0 %v1294
    %v1457 = vpop.f32.mrf.mxu0
    %v1458 = vadd.f32 0.0, %v1457
    %v1459 = vpop.f32.mrf.mxu0
    %v1460 = vadd.f32 0.0, %v1459
    %1461 = vdwg.mxu0
    %vm1462 = vcmask 1043456
    %v1463 = vrot.slane %v45, 4
    %v1464 = vrot.slane %v46, 4
    %v1465 = vsel %vm1462, %v1463, %v1464
    %v1466 = vrot.slane %v47, 4
    %v1467 = vsel %vm1462, %v1464, %v1466
    %v1468 = vsel %vm231, %v1465, 0
    %v1470 = vsel %vm231, %v1467, 0
    %v1472 = vsel %vm231, %v1466, 0
    %1474 = vmatprep.subr.mxu0 0.0
    %1475 = vmatpush1.msra.mxu0 0.0
    %1476 = vmatprep.subr.mxu0 0.0
    %1477 = vmatpush1.msra.mxu0 0.0
    %1478 = vmatprep.subr.mxu0 0.0
    %1479 = vmatpush1.msra.mxu0 0.0
    %1480 = vmatprep.subr.mxu0 0.0
    %1481 = vmatpush1.msra.mxu0 0.0
    %1482 = vmatprep.subr.mxu0 0.0
    %1483 = vmatpush1.msra.mxu0 0.0
    %1484 = vmatprep.subr.mxu0 0.0
    %1485 = vmatpush1.msra.mxu0 0.0
    %1486 = vmatprep.subr.mxu0 0.0
    %1487 = vmatpush1.msra.mxu0 0.0
    %1488 = vmatprep.subr.mxu0 0.0
    %1489 = vmatpush1.msra.mxu0 0.0
    %1490 = vmatprep.subr.mxu0 %v116
    %1491 = vmatpush1.msra.mxu0 %v115
    %1492 = vmatprep.subr.mxu0 %v112
    %1493 = vmatpush1.msra.mxu0 %v111
    %1494 = vmatprep.subr.mxu0 %v108
    %1495 = vmatpush1.msra.mxu0 %v107
    %1496 = vmatprep.subr.mxu0 %v104
    %1497 = vmatpush1.msra.mxu0 %v103
    %1498 = vmatprep.subr.mxu0 %v100
    %1499 = vmatpush1.msra.mxu0 %v99
    %1500 = vmatprep.subr.mxu0 %v96
    %1501 = vmatpush1.msra.mxu0 %v95
    %1502 = vmatprep.subr.mxu0 %v92
    %1503 = vmatpush1.msra.mxu0 %v91
    %1504 = vmatprep.subr.mxu0 %v88
    %1505 = vmatpush1.msra.mxu0 %v87
    %1506 = vmatprep.subr.mxu0 0.0
    %1507 = vmatpush2.msra.mxu0 0.0
    %1508 = vmatprep.subr.mxu0 0.0
    %1509 = vmatpush2.msra.mxu0 0.0
    %1510 = vmatprep.subr.mxu0 0.0
    %1511 = vmatpush2.msra.mxu0 0.0
    %1512 = vmatprep.subr.mxu0 0.0
    %1513 = vmatpush2.msra.mxu0 0.0
    %1514 = vmatprep.subr.mxu0 0.0
    %1515 = vmatpush2.msra.mxu0 0.0
    %1516 = vmatprep.subr.mxu0 0.0
    %1517 = vmatpush2.msra.mxu0 0.0
    %1518 = vmatprep.subr.mxu0 0.0
    %1519 = vmatpush2.msra.mxu0 0.0
    %1520 = vmatprep.subr.mxu0 0.0
    %1521 = vmatpush2.msra.mxu0 0.0
    %1522 = vmatprep.subr.mxu0 0.0
    %1523 = vmatpush2.msra.mxu0 0.0
    %1524 = vmatprep.subr.mxu0 0.0
    %1525 = vmatpush2.msra.mxu0 0.0
    %1526 = vmatprep.subr.mxu0 0.0
    %1527 = vmatpush2.msra.mxu0 0.0
    %1528 = vmatprep.subr.mxu0 0.0
    %1529 = vmatpush2.msra.mxu0 0.0
    %1530 = vmatprep.subr.mxu0 0.0
    %1531 = vmatpush2.msra.mxu0 0.0
    %1532 = vmatprep.subr.mxu0 0.0
    %1533 = vmatpush2.msra.mxu0 0.0
    %1534 = vmatprep.subr.mxu0 0.0
    %1535 = vmatpush2.msra.mxu0 0.0
    %1536 = vmatprep.subr.mxu0 0.0
    %1537 = vmatpush2.msra.mxu0 0.0
    %1538 = vmatprep.mubr.f32.mxu0 0.0
    %1539 = vmatmul.mubr.f32.gmra.mxu0 %v1468
    %v1540 = vpop.f32.mrf.mxu0
    %v1541 = vadd.f32 %v1363, %v1540
    %v1542 = vpop.f32.mrf.mxu0
    %v1543 = vadd.f32 %v1365, %v1542
    %1544 = vmatprep.mubr.f32.mxu0 0.0
    %1545 = vmatmul.mubr.f32.gmra.mxu0 %v1470
    %v1546 = vpop.f32.mrf.mxu0
    %v1547 = vadd.f32 %v1369, %v1546
    %v1548 = vpop.f32.mrf.mxu0
    %v1549 = vadd.f32 %v1371, %v1548
    %1550 = vmatprep.mubr.f32.mxu0 0.0
    %1551 = vmatmul.mubr.f32.gmra.mxu0 %v1472
    %v1552 = vpop.f32.mrf.mxu0
    %v1553 = vadd.f32 %v1375, %v1552
    %v1554 = vpop.f32.mrf.mxu0
    %v1555 = vadd.f32 %v1377, %v1554
    %1556 = vdwg.mxu0
    %1557 = vmatprep.subr.mxu0 0.0
    %1558 = vmatpush1.msra.mxu0 0.0
    %1559 = vmatprep.subr.mxu0 0.0
    %1560 = vmatpush1.msra.mxu0 0.0
    %1561 = vmatprep.subr.mxu0 0.0
    %1562 = vmatpush1.msra.mxu0 0.0
    %1563 = vmatprep.subr.mxu0 0.0
    %1564 = vmatpush1.msra.mxu0 0.0
    %1565 = vmatprep.subr.mxu0 0.0
    %1566 = vmatpush1.msra.mxu0 0.0
    %1567 = vmatprep.subr.mxu0 0.0
    %1568 = vmatpush1.msra.mxu0 0.0
    %1569 = vmatprep.subr.mxu0 0.0
    %1570 = vmatpush1.msra.mxu0 0.0
    %1571 = vmatprep.subr.mxu0 0.0
    %1572 = vmatpush1.msra.mxu0 0.0
    %1573 = vmatprep.subr.mxu0 %v118
    %1574 = vmatpush1.msra.mxu0 %v117
    %1575 = vmatprep.subr.mxu0 %v114
    %1576 = vmatpush1.msra.mxu0 %v113
    %1577 = vmatprep.subr.mxu0 %v110
    %1578 = vmatpush1.msra.mxu0 %v109
    %1579 = vmatprep.subr.mxu0 %v106
    %1580 = vmatpush1.msra.mxu0 %v105
    %1581 = vmatprep.subr.mxu0 %v102
    %1582 = vmatpush1.msra.mxu0 %v101
    %1583 = vmatprep.subr.mxu0 %v98
    %1584 = vmatpush1.msra.mxu0 %v97
    %1585 = vmatprep.subr.mxu0 %v94
    %1586 = vmatpush1.msra.mxu0 %v93
    %1587 = vmatprep.subr.mxu0 %v90
    %1588 = vmatpush1.msra.mxu0 %v89
    %1589 = vmatprep.subr.mxu0 0.0
    %1590 = vmatpush2.msra.mxu0 0.0
    %1591 = vmatprep.subr.mxu0 0.0
    %1592 = vmatpush2.msra.mxu0 0.0
    %1593 = vmatprep.subr.mxu0 0.0
    %1594 = vmatpush2.msra.mxu0 0.0
    %1595 = vmatprep.subr.mxu0 0.0
    %1596 = vmatpush2.msra.mxu0 0.0
    %1597 = vmatprep.subr.mxu0 0.0
    %1598 = vmatpush2.msra.mxu0 0.0
    %1599 = vmatprep.subr.mxu0 0.0
    %1600 = vmatpush2.msra.mxu0 0.0
    %1601 = vmatprep.subr.mxu0 0.0
    %1602 = vmatpush2.msra.mxu0 0.0
    %1603 = vmatprep.subr.mxu0 0.0
    %1604 = vmatpush2.msra.mxu0 0.0
    %1605 = vmatprep.subr.mxu0 0.0
    %1606 = vmatpush2.msra.mxu0 0.0
    %1607 = vmatprep.subr.mxu0 0.0
    %1608 = vmatpush2.msra.mxu0 0.0
    %1609 = vmatprep.subr.mxu0 0.0
    %1610 = vmatpush2.msra.mxu0 0.0
    %1611 = vmatprep.subr.mxu0 0.0
    %1612 = vmatpush2.msra.mxu0 0.0
    %1613 = vmatprep.subr.mxu0 0.0
    %1614 = vmatpush2.msra.mxu0 0.0
    %1615 = vmatprep.subr.mxu0 0.0
    %1616 = vmatpush2.msra.mxu0 0.0
    %1617 = vmatprep.subr.mxu0 0.0
    %1618 = vmatpush2.msra.mxu0 0.0
    %1619 = vmatprep.subr.mxu0 0.0
    %1620 = vmatpush2.msra.mxu0 0.0
    %1621 = vmatprep.mubr.f32.mxu0 0.0
    %1622 = vmatmul.mubr.f32.gmra.mxu0 %v1468
    %v1623 = vpop.f32.mrf.mxu0
    %v1624 = vadd.f32 %v1446, %v1623
    %v1625 = vpop.f32.mrf.mxu0
    %v1626 = vadd.f32 %v1448, %v1625
    %1627 = vmatprep.mubr.f32.mxu0 0.0
    %1628 = vmatmul.mubr.f32.gmra.mxu0 %v1470
    %v1629 = vpop.f32.mrf.mxu0
    %v1630 = vadd.f32 %v1452, %v1629
    %v1631 = vpop.f32.mrf.mxu0
    %v1632 = vadd.f32 %v1454, %v1631
    %1633 = vmatprep.mubr.f32.mxu0 0.0
    %1634 = vmatmul.mubr.f32.gmra.mxu0 %v1472
    %v1635 = vpop.f32.mrf.mxu0
    %v1636 = vadd.f32 %v1458, %v1635
    %v1637 = vpop.f32.mrf.mxu0
    %v1638 = vadd.f32 %v1460, %v1637
    %1639 = vdwg.mxu0
    %vm1640 = vcmask 1041408
    %v1641 = vrot.slane %v45, 6
    %v1642 = vrot.slane %v46, 6
    %v1643 = vsel %vm1640, %v1641, %v1642
    %v1644 = vrot.slane %v47, 6
    %v1645 = vsel %vm1640, %v1642, %v1644
    %v1646 = vsel %vm231, %v1643, 0
    %v1648 = vsel %vm231, %v1645, 0
    %v1650 = vsel %vm231, %v1644, 0
    %1652 = vmatprep.subr.mxu0 0.0
    %1653 = vmatpush1.msra.mxu0 0.0
    %1654 = vmatprep.subr.mxu0 0.0
    %1655 = vmatpush1.msra.mxu0 0.0
    %1656 = vmatprep.subr.mxu0 0.0
    %1657 = vmatpush1.msra.mxu0 0.0
    %1658 = vmatprep.subr.mxu0 0.0
    %1659 = vmatpush1.msra.mxu0 0.0
    %1660 = vmatprep.subr.mxu0 0.0
    %1661 = vmatpush1.msra.mxu0 0.0
    %1662 = vmatprep.subr.mxu0 0.0
    %1663 = vmatpush1.msra.mxu0 0.0
    %1664 = vmatprep.subr.mxu0 0.0
    %1665 = vmatpush1.msra.mxu0 0.0
    %1666 = vmatprep.subr.mxu0 0.0
    %1667 = vmatpush1.msra.mxu0 0.0
    %1668 = vmatprep.subr.mxu0 %v180
    %1669 = vmatpush1.msra.mxu0 %v179
    %1670 = vmatprep.subr.mxu0 %v176
    %1671 = vmatpush1.msra.mxu0 %v175
    %1672 = vmatprep.subr.mxu0 %v172
    %1673 = vmatpush1.msra.mxu0 %v171
    %1674 = vmatprep.subr.mxu0 %v168
    %1675 = vmatpush1.msra.mxu0 %v167
    %1676 = vmatprep.subr.mxu0 %v164
    %1677 = vmatpush1.msra.mxu0 %v163
    %1678 = vmatprep.subr.mxu0 %v160
    %1679 = vmatpush1.msra.mxu0 %v159
    %1680 = vmatprep.subr.mxu0 %v156
    %1681 = vmatpush1.msra.mxu0 %v155
    %1682 = vmatprep.subr.mxu0 %v152
    %1683 = vmatpush1.msra.mxu0 %v151
    %1684 = vmatprep.subr.mxu0 0.0
    %1685 = vmatpush2.msra.mxu0 0.0
    %1686 = vmatprep.subr.mxu0 0.0
    %1687 = vmatpush2.msra.mxu0 0.0
    %1688 = vmatprep.subr.mxu0 0.0
    %1689 = vmatpush2.msra.mxu0 0.0
    %1690 = vmatprep.subr.mxu0 0.0
    %1691 = vmatpush2.msra.mxu0 0.0
    %1692 = vmatprep.subr.mxu0 0.0
    %1693 = vmatpush2.msra.mxu0 0.0
    %1694 = vmatprep.subr.mxu0 0.0
    %1695 = vmatpush2.msra.mxu0 0.0
    %1696 = vmatprep.subr.mxu0 0.0
    %1697 = vmatpush2.msra.mxu0 0.0
    %1698 = vmatprep.subr.mxu0 0.0
    %1699 = vmatpush2.msra.mxu0 0.0
    %1700 = vmatprep.subr.mxu0 0.0
    %1701 = vmatpush2.msra.mxu0 0.0
    %1702 = vmatprep.subr.mxu0 0.0
    %1703 = vmatpush2.msra.mxu0 0.0
    %1704 = vmatprep.subr.mxu0 0.0
    %1705 = vmatpush2.msra.mxu0 0.0
    %1706 = vmatprep.subr.mxu0 0.0
    %1707 = vmatpush2.msra.mxu0 0.0
    %1708 = vmatprep.subr.mxu0 0.0
    %1709 = vmatpush2.msra.mxu0 0.0
    %1710 = vmatprep.subr.mxu0 0.0
    %1711 = vmatpush2.msra.mxu0 0.0
    %1712 = vmatprep.subr.mxu0 0.0
    %1713 = vmatpush2.msra.mxu0 0.0
    %1714 = vmatprep.subr.mxu0 0.0
    %1715 = vmatpush2.msra.mxu0 0.0
    %1716 = vmatprep.mubr.f32.mxu0 0.0
    %1717 = vmatmul.mubr.f32.gmra.mxu0 %v1646
    %v1718 = vpop.f32.mrf.mxu0
    %v1719 = vadd.f32 0.0, %v1718
    %v1720 = vpop.f32.mrf.mxu0
    %v1721 = vadd.f32 0.0, %v1720
    %1722 = vmatprep.mubr.f32.mxu0 0.0
    %1723 = vmatmul.mubr.f32.gmra.mxu0 %v1648
    %v1724 = vpop.f32.mrf.mxu0
    %v1725 = vadd.f32 0.0, %v1724
    %v1726 = vpop.f32.mrf.mxu0
    %v1727 = vadd.f32 0.0, %v1726
    %1728 = vmatprep.mubr.f32.mxu0 0.0
    %1729 = vmatmul.mubr.f32.gmra.mxu0 %v1650
    %v1730 = vpop.f32.mrf.mxu0
    %v1731 = vadd.f32 0.0, %v1730
    %v1732 = vpop.f32.mrf.mxu0
    %v1733 = vadd.f32 0.0, %v1732
    %1734 = vdwg.mxu0
    %1735 = vmatprep.subr.mxu0 0.0
    %1736 = vmatpush1.msra.mxu0 0.0
    %1737 = vmatprep.subr.mxu0 0.0
    %1738 = vmatpush1.msra.mxu0 0.0
    %1739 = vmatprep.subr.mxu0 0.0
    %1740 = vmatpush1.msra.mxu0 0.0
    %1741 = vmatprep.subr.mxu0 0.0
    %1742 = vmatpush1.msra.mxu0 0.0
    %1743 = vmatprep.subr.mxu0 0.0
    %1744 = vmatpush1.msra.mxu0 0.0
    %1745 = vmatprep.subr.mxu0 0.0
    %1746 = vmatpush1.msra.mxu0 0.0
    %1747 = vmatprep.subr.mxu0 0.0
    %1748 = vmatpush1.msra.mxu0 0.0
    %1749 = vmatprep.subr.mxu0 0.0
    %1750 = vmatpush1.msra.mxu0 0.0
    %1751 = vmatprep.subr.mxu0 %v182
    %1752 = vmatpush1.msra.mxu0 %v181
    %1753 = vmatprep.subr.mxu0 %v178
    %1754 = vmatpush1.msra.mxu0 %v177
    %1755 = vmatprep.subr.mxu0 %v174
    %1756 = vmatpush1.msra.mxu0 %v173
    %1757 = vmatprep.subr.mxu0 %v170
    %1758 = vmatpush1.msra.mxu0 %v169
    %1759 = vmatprep.subr.mxu0 %v166
    %1760 = vmatpush1.msra.mxu0 %v165
    %1761 = vmatprep.subr.mxu0 %v162
    %1762 = vmatpush1.msra.mxu0 %v161
    %1763 = vmatprep.subr.mxu0 %v158
    %1764 = vmatpush1.msra.mxu0 %v157
    %1765 = vmatprep.subr.mxu0 %v154
    %1766 = vmatpush1.msra.mxu0 %v153
    %1767 = vmatprep.subr.mxu0 0.0
    %1768 = vmatpush2.msra.mxu0 0.0
    %1769 = vmatprep.subr.mxu0 0.0
    %1770 = vmatpush2.msra.mxu0 0.0
    %1771 = vmatprep.subr.mxu0 0.0
    %1772 = vmatpush2.msra.mxu0 0.0
    %1773 = vmatprep.subr.mxu0 0.0
    %1774 = vmatpush2.msra.mxu0 0.0
    %1775 = vmatprep.subr.mxu0 0.0
    %1776 = vmatpush2.msra.mxu0 0.0
    %1777 = vmatprep.subr.mxu0 0.0
    %1778 = vmatpush2.msra.mxu0 0.0
    %1779 = vmatprep.subr.mxu0 0.0
    %1780 = vmatpush2.msra.mxu0 0.0
    %1781 = vmatprep.subr.mxu0 0.0
    %1782 = vmatpush2.msra.mxu0 0.0
    %1783 = vmatprep.subr.mxu0 0.0
    %1784 = vmatpush2.msra.mxu0 0.0
    %1785 = vmatprep.subr.mxu0 0.0
    %1786 = vmatpush2.msra.mxu0 0.0
    %1787 = vmatprep.subr.mxu0 0.0
    %1788 = vmatpush2.msra.mxu0 0.0
    %1789 = vmatprep.subr.mxu0 0.0
    %1790 = vmatpush2.msra.mxu0 0.0
    %1791 = vmatprep.subr.mxu0 0.0
    %1792 = vmatpush2.msra.mxu0 0.0
    %1793 = vmatprep.subr.mxu0 0.0
    %1794 = vmatpush2.msra.mxu0 0.0
    %1795 = vmatprep.subr.mxu0 0.0
    %1796 = vmatpush2.msra.mxu0 0.0
    %1797 = vmatprep.subr.mxu0 0.0
    %1798 = vmatpush2.msra.mxu0 0.0
    %1799 = vmatprep.mubr.f32.mxu0 0.0
    %1800 = vmatmul.mubr.f32.gmra.mxu0 %v1646
    %v1801 = vpop.f32.mrf.mxu0
    %v1802 = vadd.f32 0.0, %v1801
    %v1803 = vpop.f32.mrf.mxu0
    %v1804 = vadd.f32 0.0, %v1803
    %1805 = vmatprep.mubr.f32.mxu0 0.0
    %1806 = vmatmul.mubr.f32.gmra.mxu0 %v1648
    %v1807 = vpop.f32.mrf.mxu0
    %v1808 = vadd.f32 0.0, %v1807
    %v1809 = vpop.f32.mrf.mxu0
    %v1810 = vadd.f32 0.0, %v1809
    %1811 = vmatprep.mubr.f32.mxu0 0.0
    %1812 = vmatmul.mubr.f32.gmra.mxu0 %v1650
    %v1813 = vpop.f32.mrf.mxu0
    %v1814 = vadd.f32 0.0, %v1813
    %v1815 = vpop.f32.mrf.mxu0
    %v1816 = vadd.f32 0.0, %v1815
    %1817 = vdwg.mxu0
    %v1818 = vadd.f32 %v1541, %v1719
    %v1819 = vadd.f32 %v1543, %v1721
    %v1820 = vadd.f32 %v1624, %v1802
    %v1821 = vadd.f32 %v1626, %v1804
    %v1822 = vadd.f32 %v1547, %v1725
    %v1823 = vadd.f32 %v1549, %v1727
    %v1824 = vadd.f32 %v1630, %v1808
    %v1825 = vadd.f32 %v1632, %v1810
    %v1826 = vadd.f32 %v1553, %v1731
    %v1827 = vadd.f32 %v1555, %v1733
    %v1828 = vadd.f32 %v1636, %v1814
    %v1829 = vadd.f32 %v1638, %v1816
    %vm1830 = vcmask 1040384
    %v1831 = vrot.slane %v45, 7
    %v1832 = vrot.slane %v46, 7
    %v1833 = vsel %vm1830, %v1831, %v1832
    %v1834 = vrot.slane %v47, 7
    %v1835 = vsel %vm1830, %v1832, %v1834
    %v1836 = vsel %vm231, %v1833, 0
    %v1838 = vsel %vm231, %v1835, 0
    %v1840 = vsel %vm231, %v1834, 0
    %1842 = vmatprep.subr.mxu0 0.0
    %1843 = vmatpush1.msra.mxu0 0.0
    %1844 = vmatprep.subr.mxu0 0.0
    %1845 = vmatpush1.msra.mxu0 0.0
    %1846 = vmatprep.subr.mxu0 0.0
    %1847 = vmatpush1.msra.mxu0 0.0
    %1848 = vmatprep.subr.mxu0 0.0
    %1849 = vmatpush1.msra.mxu0 0.0
    %1850 = vmatprep.subr.mxu0 0.0
    %1851 = vmatpush1.msra.mxu0 0.0
    %1852 = vmatprep.subr.mxu0 0.0
    %1853 = vmatpush1.msra.mxu0 0.0
    %1854 = vmatprep.subr.mxu0 0.0
    %1855 = vmatpush1.msra.mxu0 0.0
    %1856 = vmatprep.subr.mxu0 0.0
    %1857 = vmatpush1.msra.mxu0 0.0
    %1858 = vmatprep.subr.mxu0 %v212
    %1859 = vmatpush1.msra.mxu0 %v211
    %1860 = vmatprep.subr.mxu0 %v208
    %1861 = vmatpush1.msra.mxu0 %v207
    %1862 = vmatprep.subr.mxu0 %v204
    %1863 = vmatpush1.msra.mxu0 %v203
    %1864 = vmatprep.subr.mxu0 %v200
    %1865 = vmatpush1.msra.mxu0 %v199
    %1866 = vmatprep.subr.mxu0 %v196
    %1867 = vmatpush1.msra.mxu0 %v195
    %1868 = vmatprep.subr.mxu0 %v192
    %1869 = vmatpush1.msra.mxu0 %v191
    %1870 = vmatprep.subr.mxu0 %v188
    %1871 = vmatpush1.msra.mxu0 %v187
    %1872 = vmatprep.subr.mxu0 %v184
    %1873 = vmatpush1.msra.mxu0 %v183
    %1874 = vmatprep.subr.mxu0 0.0
    %1875 = vmatpush2.msra.mxu0 0.0
    %1876 = vmatprep.subr.mxu0 0.0
    %1877 = vmatpush2.msra.mxu0 0.0
    %1878 = vmatprep.subr.mxu0 0.0
    %1879 = vmatpush2.msra.mxu0 0.0
    %1880 = vmatprep.subr.mxu0 0.0
    %1881 = vmatpush2.msra.mxu0 0.0
    %1882 = vmatprep.subr.mxu0 0.0
    %1883 = vmatpush2.msra.mxu0 0.0
    %1884 = vmatprep.subr.mxu0 0.0
    %1885 = vmatpush2.msra.mxu0 0.0
    %1886 = vmatprep.subr.mxu0 0.0
    %1887 = vmatpush2.msra.mxu0 0.0
    %1888 = vmatprep.subr.mxu0 0.0
    %1889 = vmatpush2.msra.mxu0 0.0
    %1890 = vmatprep.subr.mxu0 0.0
    %1891 = vmatpush2.msra.mxu0 0.0
    %1892 = vmatprep.subr.mxu0 0.0
    %1893 = vmatpush2.msra.mxu0 0.0
    %1894 = vmatprep.subr.mxu0 0.0
    %1895 = vmatpush2.msra.mxu0 0.0
    %1896 = vmatprep.subr.mxu0 0.0
    %1897 = vmatpush2.msra.mxu0 0.0
    %1898 = vmatprep.subr.mxu0 0.0
    %1899 = vmatpush2.msra.mxu0 0.0
    %1900 = vmatprep.subr.mxu0 0.0
    %1901 = vmatpush2.msra.mxu0 0.0
    %1902 = vmatprep.subr.mxu0 0.0
    %1903 = vmatpush2.msra.mxu0 0.0
    %1904 = vmatprep.subr.mxu0 0.0
    %1905 = vmatpush2.msra.mxu0 0.0
    %1906 = vmatprep.mubr.f32.mxu0 0.0
    %1907 = vmatmul.mubr.f32.gmra.mxu0 %v1836
    %v1908 = vpop.f32.mrf.mxu0
    %v1909 = vadd.f32 0.0, %v1908
    %v1910 = vpop.f32.mrf.mxu0
    %v1911 = vadd.f32 0.0, %v1910
    %1912 = vmatprep.mubr.f32.mxu0 0.0
    %1913 = vmatmul.mubr.f32.gmra.mxu0 %v1838
    %v1914 = vpop.f32.mrf.mxu0
    %v1915 = vadd.f32 0.0, %v1914
    %v1916 = vpop.f32.mrf.mxu0
    %v1917 = vadd.f32 0.0, %v1916
    %1918 = vmatprep.mubr.f32.mxu0 0.0
    %1919 = vmatmul.mubr.f32.gmra.mxu0 %v1840
    %v1920 = vpop.f32.mrf.mxu0
    %v1921 = vadd.f32 0.0, %v1920
    %v1922 = vpop.f32.mrf.mxu0
    %v1923 = vadd.f32 0.0, %v1922
    %1924 = vdwg.mxu0
    %1925 = vmatprep.subr.mxu0 0.0
    %1926 = vmatpush1.msra.mxu0 0.0
    %1927 = vmatprep.subr.mxu0 0.0
    %1928 = vmatpush1.msra.mxu0 0.0
    %1929 = vmatprep.subr.mxu0 0.0
    %1930 = vmatpush1.msra.mxu0 0.0
    %1931 = vmatprep.subr.mxu0 0.0
    %1932 = vmatpush1.msra.mxu0 0.0
    %1933 = vmatprep.subr.mxu0 0.0
    %1934 = vmatpush1.msra.mxu0 0.0
    %1935 = vmatprep.subr.mxu0 0.0
    %1936 = vmatpush1.msra.mxu0 0.0
    %1937 = vmatprep.subr.mxu0 0.0
    %1938 = vmatpush1.msra.mxu0 0.0
    %1939 = vmatprep.subr.mxu0 0.0
    %1940 = vmatpush1.msra.mxu0 0.0
    %1941 = vmatprep.subr.mxu0 %v214
    %1942 = vmatpush1.msra.mxu0 %v213
    %1943 = vmatprep.subr.mxu0 %v210
    %1944 = vmatpush1.msra.mxu0 %v209
    %1945 = vmatprep.subr.mxu0 %v206
    %1946 = vmatpush1.msra.mxu0 %v205
    %1947 = vmatprep.subr.mxu0 %v202
    %1948 = vmatpush1.msra.mxu0 %v201
    %1949 = vmatprep.subr.mxu0 %v198
    %1950 = vmatpush1.msra.mxu0 %v197
    %1951 = vmatprep.subr.mxu0 %v194
    %1952 = vmatpush1.msra.mxu0 %v193
    %1953 = vmatprep.subr.mxu0 %v190
    %1954 = vmatpush1.msra.mxu0 %v189
    %1955 = vmatprep.subr.mxu0 %v186
    %1956 = vmatpush1.msra.mxu0 %v185
    %1957 = vmatprep.subr.mxu0 0.0
    %1958 = vmatpush2.msra.mxu0 0.0
    %1959 = vmatprep.subr.mxu0 0.0
    %1960 = vmatpush2.msra.mxu0 0.0
    %1961 = vmatprep.subr.mxu0 0.0
    %1962 = vmatpush2.msra.mxu0 0.0
    %1963 = vmatprep.subr.mxu0 0.0
    %1964 = vmatpush2.msra.mxu0 0.0
    %1965 = vmatprep.subr.mxu0 0.0
    %1966 = vmatpush2.msra.mxu0 0.0
    %1967 = vmatprep.subr.mxu0 0.0
    %1968 = vmatpush2.msra.mxu0 0.0
    %1969 = vmatprep.subr.mxu0 0.0
    %1970 = vmatpush2.msra.mxu0 0.0
    %1971 = vmatprep.subr.mxu0 0.0
    %1972 = vmatpush2.msra.mxu0 0.0
    %1973 = vmatprep.subr.mxu0 0.0
    %1974 = vmatpush2.msra.mxu0 0.0
    %1975 = vmatprep.subr.mxu0 0.0
    %1976 = vmatpush2.msra.mxu0 0.0
    %1977 = vmatprep.subr.mxu0 0.0
    %1978 = vmatpush2.msra.mxu0 0.0
    %1979 = vmatprep.subr.mxu0 0.0
    %1980 = vmatpush2.msra.mxu0 0.0
    %1981 = vmatprep.subr.mxu0 0.0
    %1982 = vmatpush2.msra.mxu0 0.0
    %1983 = vmatprep.subr.mxu0 0.0
    %1984 = vmatpush2.msra.mxu0 0.0
    %1985 = vmatprep.subr.mxu0 0.0
    %1986 = vmatpush2.msra.mxu0 0.0
    %1987 = vmatprep.subr.mxu0 0.0
    %1988 = vmatpush2.msra.mxu0 0.0
    %1989 = vmatprep.mubr.f32.mxu0 0.0
    %1990 = vmatmul.mubr.f32.gmra.mxu0 %v1836
    %v1991 = vpop.f32.mrf.mxu0
    %v1992 = vadd.f32 0.0, %v1991
    %v1993 = vpop.f32.mrf.mxu0
    %v1994 = vadd.f32 0.0, %v1993
    %1995 = vmatprep.mubr.f32.mxu0 0.0
    %1996 = vmatmul.mubr.f32.gmra.mxu0 %v1838
    %v1997 = vpop.f32.mrf.mxu0
    %v1998 = vadd.f32 0.0, %v1997
    %v1999 = vpop.f32.mrf.mxu0
    %v2000 = vadd.f32 0.0, %v1999
    %2001 = vmatprep.mubr.f32.mxu0 0.0
    %2002 = vmatmul.mubr.f32.gmra.mxu0 %v1840
    %v2003 = vpop.f32.mrf.mxu0
    %v2004 = vadd.f32 0.0, %v2003
    %v2005 = vpop.f32.mrf.mxu0
    %v2006 = vadd.f32 0.0, %v2005
    %2007 = vdwg.mxu0
    %v2008 = vadd.f32 %v1818, %v1909
    %v2009 = vadd.f32 %v1819, %v1911
    %v2010 = vadd.f32 %v1820, %v1992
    %v2011 = vadd.f32 %v1821, %v1994
    %v2012 = vadd.f32 %v1822, %v1915
    %v2013 = vadd.f32 %v1823, %v1917
    %v2014 = vadd.f32 %v1824, %v1998
    %v2015 = vadd.f32 %v1825, %v2000
    %v2016 = vadd.f32 %v1826, %v1921
    %v2017 = vadd.f32 %v1827, %v1923
    %v2018 = vadd.f32 %v1828, %v2004
    %v2019 = vadd.f32 %v1829, %v2006
    %v2020 = vmul.f32 %v2008, %v2008
    %v2021 = vmul.f32 %v2009, %v2009
    %v2022 = vmul.f32 %v2012, %v2012
    %v2023 = vmul.f32 %v2013, %v2013
    %v2024 = vmul.f32 %v2016, %v2016
    %v2025 = vmul.f32 %v2017, %v2017
    %v2026 = vmul.f32 %v2010, %v2010
    %v2027 = vmul.f32 %v2011, %v2011
    %v2028 = vmul.f32 %v2014, %v2014
    %v2029 = vmul.f32 %v2015, %v2015
    %v2030 = vmul.f32 %v2018, %v2018
    %v2031 = vmul.f32 %v2019, %v2019
    %v2032 = vadd.f32 %v2020, %v2026
    %v2033 = vadd.f32 %v2021, %v2027
    %v2034 = vadd.f32 %v2022, %v2028
    %v2035 = vadd.f32 %v2023, %v2029
    %v2036 = vadd.f32 %v2024, %v2030
    %v2037 = vadd.f32 %v2025, %v2031
    %2038 = vmatprep.subr.mxu0 0.0
    %2039 = vmatpush1.msra.mxu0 %v66
    %2040 = vmatprep.subr.mxu0 0.0
    %2041 = vmatpush1.msra.mxu0 %v65
    %2042 = vmatprep.subr.mxu0 0.0
    %2043 = vmatpush1.msra.mxu0 %v64
    %2044 = vmatprep.subr.mxu0 0.0
    %2045 = vmatpush1.msra.mxu0 %v63
    %2046 = vmatprep.subr.mxu0 0.0
    %2047 = vmatpush1.msra.mxu0 %v62
    %2048 = vmatprep.subr.mxu0 0.0
    %2049 = vmatpush1.msra.mxu0 %v61
    %2050 = vmatprep.subr.mxu0 0.0
    %2051 = vmatpush1.msra.mxu0 %v60
    %2052 = vmatprep.subr.mxu0 0.0
    %2053 = vmatpush1.msra.mxu0 %v59
    %2054 = vmatprep.subr.mxu0 0.0
    %2055 = vmatpush1.msra.mxu0 %v58
    %2056 = vmatprep.subr.mxu0 0.0
    %2057 = vmatpush1.msra.mxu0 %v57
    %2058 = vmatprep.subr.mxu0 0.0
    %2059 = vmatpush1.msra.mxu0 %v56
    %2060 = vmatprep.subr.mxu0 0.0
    %2061 = vmatpush1.msra.mxu0 %v55
    %2062 = vmatprep.subr.mxu0 0.0
    %2063 = vmatpush1.msra.mxu0 %v54
    %2064 = vmatprep.subr.mxu0 0.0
    %2065 = vmatpush1.msra.mxu0 %v53
    %2066 = vmatprep.subr.mxu0 0.0
    %2067 = vmatpush1.msra.mxu0 %v52
    %2068 = vmatprep.subr.mxu0 0.0
    %2069 = vmatpush1.msra.mxu0 %v51
    %2070 = vmatprep.subr.mxu0 0.0
    %2071 = vmatpush2.msra.mxu0 %v82
    %2072 = vmatprep.subr.mxu0 0.0
    %2073 = vmatpush2.msra.mxu0 %v81
    %2074 = vmatprep.subr.mxu0 0.0
    %2075 = vmatpush2.msra.mxu0 %v80
    %2076 = vmatprep.subr.mxu0 0.0
    %2077 = vmatpush2.msra.mxu0 %v79
    %2078 = vmatprep.subr.mxu0 0.0
    %2079 = vmatpush2.msra.mxu0 %v78
    %2080 = vmatprep.subr.mxu0 0.0
    %2081 = vmatpush2.msra.mxu0 %v77
    %2082 = vmatprep.subr.mxu0 0.0
    %2083 = vmatpush2.msra.mxu0 %v76
    %2084 = vmatprep.subr.mxu0 0.0
    %2085 = vmatpush2.msra.mxu0 %v75
    %2086 = vmatprep.subr.mxu0 0.0
    %2087 = vmatpush2.msra.mxu0 %v74
    %2088 = vmatprep.subr.mxu0 0.0
    %2089 = vmatpush2.msra.mxu0 %v73
    %2090 = vmatprep.subr.mxu0 0.0
    %2091 = vmatpush2.msra.mxu0 %v72
    %2092 = vmatprep.subr.mxu0 0.0
    %2093 = vmatpush2.msra.mxu0 %v71
    %2094 = vmatprep.subr.mxu0 0.0
    %2095 = vmatpush2.msra.mxu0 %v70
    %2096 = vmatprep.subr.mxu0 0.0
    %2097 = vmatpush2.msra.mxu0 %v69
    %2098 = vmatprep.subr.mxu0 0.0
    %2099 = vmatpush2.msra.mxu0 %v68
    %2100 = vmatprep.subr.mxu0 0.0
    %2101 = vmatpush2.msra.mxu0 %v67
    %2102 = vmatprep.mubr.f32.mxu0 %v2033
    %2103 = vmatmul.mubr.f32.gmra.mxu0 %v2032
    %v2104 = vpop.f32.mrf.mxu0
    %v2105 = vadd.f32 1e-06, %v2104
    %v2106 = vpop.f32.mrf.mxu0
    %2107 = vmatprep.mubr.f32.mxu0 %v2035
    %2108 = vmatmul.mubr.f32.gmra.mxu0 %v2034
    %v2109 = vpop.f32.mrf.mxu0
    %v2110 = vadd.f32 1e-06, %v2109
    %v2111 = vpop.f32.mrf.mxu0
    %2112 = vmatprep.mubr.f32.mxu0 %v2037
    %2113 = vmatmul.mubr.f32.gmra.mxu0 %v2036
    %v2114 = vpop.f32.mrf.mxu0
    %v2115 = vadd.f32 1e-06, %v2114
    %v2116 = vpop.f32.mrf.mxu0
    %2117 = vdwg.mxu0
    %v2118 = vlog2.pop %v2105
    %v2119 = vmul.f32 %v2118, 0.6931472
    %v2120 = vlog2.pop %v2110
    %v2121 = vmul.f32 %v2120, 0.6931472
    %v2122 = vlog2.pop %v2115
    %v2123 = vmul.f32 %v2122, 0.6931472
    %v2125 = vsel %vm1103, %v2119, 0
    %v2128 = vsel %vm1103, %v2121, 0
    %v2131 = vsel %vm1103, %v2123, 0
    %2133 = vmatprep.subr.mxu0 0.0
    %2134 = vmatpush1.msra.mxu0 0.0
    %2135 = vmatprep.subr.mxu0 0.0
    %2136 = vmatpush1.msra.mxu0 0.0
    %2137 = vmatprep.subr.mxu0 0.0
    %2138 = vmatpush1.msra.mxu0 0.0
    %2139 = vmatprep.subr.mxu0 0.0
    %2140 = vmatpush1.msra.mxu0 0.0
    %2141 = vmatprep.subr.mxu0 0.0
    %2142 = vmatpush1.msra.mxu0 0.0
    %2143 = vmatprep.subr.mxu0 0.0
    %2144 = vmatpush1.msra.mxu0 0.0
    %2145 = vmatprep.subr.mxu0 0.0
    %2146 = vmatpush1.msra.mxu0 0.0
    %2147 = vmatprep.subr.mxu0 0.0
    %2148 = vmatpush1.msra.mxu0 0.0
    %2149 = vmatprep.subr.mxu0 0.0
    %2150 = vmatpush1.msra.mxu0 0.0
    %2151 = vmatprep.subr.mxu0 0.0
    %2152 = vmatpush1.msra.mxu0 0.0
    %2153 = vmatprep.subr.mxu0 0.0
    %2154 = vmatpush1.msra.mxu0 0.0
    %2155 = vmatprep.subr.mxu0 0.0
    %2156 = vmatpush1.msra.mxu0 0.0
    %2157 = vmatprep.subr.mxu0 0.0
    %2158 = vmatpush1.msra.mxu0 %v86
    %2159 = vmatprep.subr.mxu0 0.0
    %2160 = vmatpush1.msra.mxu0 %v85
    %2161 = vmatprep.subr.mxu0 0.0
    %2162 = vmatpush1.msra.mxu0 %v84
    %2163 = vmatprep.subr.mxu0 0.0
    %2164 = vmatpush1.msra.mxu0 %v83
    %2165 = vmatprep.subr.mxu0 0.0
    %2166 = vmatpush2.msra.mxu0 0.0
    %2167 = vmatprep.subr.mxu0 0.0
    %2168 = vmatpush2.msra.mxu0 0.0
    %2169 = vmatprep.subr.mxu0 0.0
    %2170 = vmatpush2.msra.mxu0 0.0
    %2171 = vmatprep.subr.mxu0 0.0
    %2172 = vmatpush2.msra.mxu0 0.0
    %2173 = vmatprep.subr.mxu0 0.0
    %2174 = vmatpush2.msra.mxu0 0.0
    %2175 = vmatprep.subr.mxu0 0.0
    %2176 = vmatpush2.msra.mxu0 0.0
    %2177 = vmatprep.subr.mxu0 0.0
    %2178 = vmatpush2.msra.mxu0 0.0
    %2179 = vmatprep.subr.mxu0 0.0
    %2180 = vmatpush2.msra.mxu0 0.0
    %2181 = vmatprep.subr.mxu0 0.0
    %2182 = vmatpush2.msra.mxu0 0.0
    %2183 = vmatprep.subr.mxu0 0.0
    %2184 = vmatpush2.msra.mxu0 0.0
    %2185 = vmatprep.subr.mxu0 0.0
    %2186 = vmatpush2.msra.mxu0 0.0
    %2187 = vmatprep.subr.mxu0 0.0
    %2188 = vmatpush2.msra.mxu0 0.0
    %2189 = vmatprep.subr.mxu0 0.0
    %2190 = vmatpush2.msra.mxu0 0.0
    %2191 = vmatprep.subr.mxu0 0.0
    %2192 = vmatpush2.msra.mxu0 0.0
    %2193 = vmatprep.subr.mxu0 0.0
    %2194 = vmatpush2.msra.mxu0 0.0
    %2195 = vmatprep.subr.mxu0 0.0
    %2196 = vmatpush2.msra.mxu0 0.0
    %2197 = vmatprep.mubr.f32.mxu0 0.0
    %2198 = vmatmul.mubr.f32.gmra.mxu0 %v2125
    %v2199 = vpop.f32.mrf.mxu0
    %v2200 = vadd.f32 0.0, %v2199
    %v2201 = vpop.f32.mrf.mxu0
    %2202 = vmatprep.mubr.f32.mxu0 0.0
    %2203 = vmatmul.mubr.f32.gmra.mxu0 %v2128
    %v2204 = vpop.f32.mrf.mxu0
    %v2205 = vadd.f32 0.0, %v2204
    %v2206 = vpop.f32.mrf.mxu0
    %2207 = vmatprep.mubr.f32.mxu0 0.0
    %2208 = vmatmul.mubr.f32.gmra.mxu0 %v2131
    %v2209 = vpop.f32.mrf.mxu0
    %v2210 = vpop.f32.mrf.mxu0
    %2211 = vdwg.mxu0
    %v2212 = vsel %vm1192, %v2200, 0.0
    %v2213 = vsel %vm1192, %v2205, 0.0
    %v2214 = vadd.f32 %v2212, %v2213
    %v2215 = vrot.slane %v2214, 4
    %v2216 = vadd.f32 %v2214, %v2215
    %v2217 = vrot.slane %v2216, 2
    %v2218 = vadd.f32 %v2216, %v2217
    %v2219 = vrot.slane %v2218, 1
    %v2220 = vadd.f32 %v2218, %v2219
    %v2221 = vmul.f32 %v2220, %v1202
    %v2222 = vsub.f32 %v2200, %v2221
    %v2223 = vsub.f32 %v2205, %v2221
    %v2224 = vmul.f32 %v2222, %v2222
    %v2225 = vmul.f32 %v2223, %v2223
    %v2226 = vsel %vm1192, %v2224, 0.0
    %v2227 = vsel %vm1192, %v2225, 0.0
    %v2228 = vadd.f32 %v2226, %v2227
    %v2229 = vrot.slane %v2228, 4
    %v2230 = vadd.f32 %v2228, %v2229
    %v2231 = vrot.slane %v2230, 2
    %v2232 = vadd.f32 %v2230, %v2231
    %v2233 = vrot.slane %v2232, 1
    %v2234 = vadd.f32 %v2232, %v2233
    %v2235 = vmul.f32 %v2234, %v1202
    %v2236 = vadd.f32 %v2235, 1e-05
    %v2237 = vrsqrt.pop %v2236
    %v2238 = vmul.f32 %v2222, %v2237
    %v2239 = vmul.f32 %v2223, %v2237
    %v2240 = vmul.f32 %v2238, %v1226
    %v2241 = vmul.f32 %v2239, %v1226
    %v2242 = vadd.f32 %v2240, %v1234
    %v2243 = vadd.f32 %v2241, %v1234
    %2246 = vrot.lane.b32.xlu0 %v2242, 16
    %v2247 = vpop.permute.xlu0 %2246
    %2248 = vrot.lane.b32.xlu0 %v2243, 16
    %v2249 = vpop.permute.xlu0 %2248
    %vm2252 = vcmask 261248
    %2253 = vst.msk [vmem:[#allocation5] sm:$0xff] %vm2252, %v2247
    %2254 = vst.msk [vmem:[#allocation5 + $0x8] sm:$0xff] %vm2252, %v2249
    // Predicated region
    $region34: #{tpu_custom_call.1} parent=1 // pred_check
      _
    $region35: #{tpu_custom_call.1} parent=1 // pred_check_branch
      %2256 = sbr.rel (0) target = $region37
    $region36: #{tpu_custom_call.1} parent=1 // pred_region
      _
    $region37: #{tpu_custom_call.1} parent=1 // pred_fallthru
      _
    // Predicated region
    $region38: #{tpu_custom_call.1} parent=1 // pred_check
      _
    $region39: #{tpu_custom_call.1} parent=1 // pred_check_branch
      %2258 = sbr.rel (0) target = $region41
    $region40: #{tpu_custom_call.1} parent=1 // pred_region
      %s2260 = ssub.s32 256, 256
      %2261 = vsyncadd [#allocation4], %s2260
      %s2262 = sshll.u32 [#allocation5], 4
      %s2263 = int_to_ptr.vmem [resolvable:$true] %s2262
      %2268 = dma.vmem_to_hbm [thread:$0]  %s2263, 256, %s8, [#allocation4], 128, 128, 8
    $region41: #{tpu_custom_call.1} parent=1 // pred_fallthru
      _
    // Predicated region
    $region42: #{tpu_custom_call.1} parent=1 // pred_check
      _
    $region43: #{tpu_custom_call.1} parent=1 // pred_check_branch
      %2270 = sbr.rel (0) target = $region45
    $region44: #{tpu_custom_call.1} parent=1 // pred_region
      _
    $region45: #{tpu_custom_call.1} parent=1 // pred_fallthru
      _
    // Predicated region
    $region46: #{tpu_custom_call.1} parent=1 // pred_check
      _
    $region47: #{tpu_custom_call.1} parent=1 // pred_check_branch
      %2272 = sbr.rel (0) target = $region49
    $region48: #{tpu_custom_call.1} parent=1 // pred_region
      %2273 = dma.done [#allocation4], 256
    $region49: #{tpu_custom_call.1} parent=1 // pred_fallthru
      _
    %2274 = vsyncpa [#allocation3], 1
    %2275 = vsyncpa [#allocation4], 1

</llo_original>
